<compile_context>
chip_gen: v7x
topology: tpu7x:2x2x1
jax: 0.10.0
libtpu: 0.0.40
codegen_flags: <defaults>
</compile_context>

<pallas_src>
import jax
import jax.numpy as jnp
from jax.experimental import pallas as pl
from jax.experimental.pallas import tpu as pltpu


def down_sample_kernel(planes_ref, w1t_ref, w2t_ref, w3t_ref, brow_ref,
                       out_ref, apad_ref):
    _, Ho, WC = out_ref.shape                       # WC == Wo * C
    f32 = jnp.float32

    # ---- conv1: stride-2 conv as 6 lane-dense block-Toeplitz matmuls over the
    #      parity planes (plane[py][px][r, q*C+c] == x_padded[2r+py, 2q+px, c]).
    p = planes_ref[0]                               # (4, Ho+1, (Wo+1)*C)
    acc = jnp.dot(p[0, 0:Ho, :], w1t_ref[0], preferred_element_type=f32)
    acc += jnp.dot(p[0, 1:Ho + 1, :], w1t_ref[1], preferred_element_type=f32)
    acc += jnp.dot(p[1, 0:Ho, :], w1t_ref[2], preferred_element_type=f32)
    acc += jnp.dot(p[1, 1:Ho + 1, :], w1t_ref[3], preferred_element_type=f32)
    acc += jnp.dot(p[2, 0:Ho, :], w1t_ref[4], preferred_element_type=f32)
    acc += jnp.dot(p[3, 0:Ho, :], w1t_ref[5], preferred_element_type=f32)
    conv1 = acc + brow_ref[0:1, :]                  # (Ho, Wo*C), pre-ReLU

    # ---- zero only the two pad rows (x clipping lives in the weights) ----
    zrow = jnp.zeros((1, WC), f32)
    apad_ref[0:1, :] = zrow
    apad_ref[Ho + 1:Ho + 2, :] = zrow

    # ---- relu -> conv2 (stride 1, pad 1): 3 Toeplitz matmuls ----
    apad_ref[1:Ho + 1, :] = jnp.maximum(conv1, 0.0)
    acc = jnp.dot(apad_ref[0:Ho, :], w2t_ref[0], preferred_element_type=f32)
    acc += jnp.dot(apad_ref[1:Ho + 1, :], w2t_ref[1], preferred_element_type=f32)
    acc += jnp.dot(apad_ref[2:Ho + 2, :], w2t_ref[2], preferred_element_type=f32)
    conv2 = acc + brow_ref[1:2, :]

    # ---- relu -> conv3 (stride 1, pad 1) ----
    apad_ref[1:Ho + 1, :] = jnp.maximum(conv2, 0.0)
    acc = jnp.dot(apad_ref[0:Ho, :], w3t_ref[0], preferred_element_type=f32)
    acc += jnp.dot(apad_ref[1:Ho + 1, :], w3t_ref[1], preferred_element_type=f32)
    acc += jnp.dot(apad_ref[2:Ho + 2, :], w3t_ref[2], preferred_element_type=f32)
    conv3 = acc + brow_ref[2:3, :]

    # ---- residual add, single lane-dense output store ----
    out_ref[0] = (conv1 + conv3).astype(out_ref.dtype)


def _toeplitz_s1(w, Wo):
    """(3,3,C,C) HWIO -> (3, Wo*C, Wo*C) block-Toeplitz (x clipping folded in).

    T[ky][xi*C+ci, xo*C+co] = w[ky, xi-xo+1, ci, co] if |xi-xo| <= 1 else 0.
    """
    C = w.shape[2]
    xi = jnp.arange(Wo)
    xo = jnp.arange(Wo)
    kx = jnp.arange(3)
    sel = (xi[None, :, None] == xo[None, None, :] + kx[:, None, None] - 1)
    sel = sel.astype(w.dtype)                                    # (3, Wo, Wo)
    t = jnp.einsum('ykio,kxz->yxizo', w, sel)                    # (3,Wo,C,Wo,C)
    return t.reshape(3, Wo * C, Wo * C)


def _toeplitz_s2(w1, Wo):
    """(3,3,C,C) HWIO -> (6, (Wo+1)*C, Wo*C) stride-2 weights per parity plane.

    Order matches the 6 dots in the kernel:
      [pee@row0 (ky=0), pee@row1 (ky=2), peo@row0 (ky=0), peo@row1 (ky=2),
       poe@row0 (ky=1), poo@row0 (ky=1)]
    """
    C = w1.shape[2]
    qi = jnp.arange(Wo + 1)
    xo = jnp.arange(Wo)
    qx = jnp.arange(2)
    sel_e = (qi[None, :, None] == xo[None, None, :] + qx[:, None, None])
    sel_e = sel_e.astype(w1.dtype)                               # (2, Wo+1, Wo)
    sel_o = (qi[:, None] == xo[None, :]).astype(w1.dtype)        # (Wo+1, Wo)

    def even(ky):   # kx in {0, 2} -> plane col offsets qx in {0, 1}
        return jnp.einsum('kio,kqz->qizo', w1[ky, ::2], sel_e
                          ).reshape((Wo + 1) * C, Wo * C)

    def odd(ky):    # kx == 1 -> plane col offset 0
        return jnp.einsum('io,qz->qizo', w1[ky, 1], sel_o
                          ).reshape((Wo + 1) * C, Wo * C)

    return jnp.stack([even(0), even(2), odd(0), odd(2), even(1), odd(1)])


def _tile_padded_bytes(shape, itemsize=4):
    """f32 VMEM footprint of `shape` after (8,128) tile padding."""
    rows = shape[-2] if len(shape) >= 2 else 1
    lanes = shape[-1]
    outer = 1
    for d in shape[:-2]:
        outer *= d
    return outer * (((rows + 7) // 8) * 8) * (((lanes + 127) // 128) * 128) * itemsize


@jax.jit
def down_sample_block(x_nchw, w1, b1, w2, b2, w3, b3):
    """Forward pass equivalent to the PyTorch down_sample_block.

    x_nchw : (N, C, H, W) float32
    w*     : (3, 3, C_in, C_out) float32   (HWIO)
    b*     : (1, C_out) float32
    returns: (N, C, H_out, W_out) float32, H_out = (H-1)//2 + 1
    """
    x = jnp.transpose(x_nchw, (0, 2, 3, 1)).astype(jnp.float32)   # -> NHWC
    N, H, W, C = x.shape
    Ho = (H - 1) // 2 + 1
    Wo = (W - 1) // 2 + 1
    WC = Wo * C

    # --- wrapper glue (~1x input bytes): pad by 1, split into the four
    #     stride-2 parity planes, packed lane-dense as (N, 4, Ho+1, (Wo+1)*C).
    xp = jnp.pad(x, ((0, 0), (1, 1), (1, 1), (0, 0)))

    def parity_plane(py, px):
        p = xp[:, py::2, px::2, :]
        ph = Ho + 1 - p.shape[1]
        pw = Wo + 1 - p.shape[2]
        if ph or pw:   # odd H/W only; the padded rows/cols hit zero weights
            p = jnp.pad(p, ((0, 0), (0, ph), (0, pw), (0, 0)))
        return p

    planes = jnp.stack([parity_plane(0, 0), parity_plane(0, 1),
                        parity_plane(1, 0), parity_plane(1, 1)], axis=1)
    planes = planes.reshape(N, 4, Ho + 1, (Wo + 1) * C)

    # --- block-Toeplitz weights + lane-replicated bias rows ---
    w1t = _toeplitz_s2(w1, Wo)                      # (6, (Wo+1)*C, Wo*C)
    w2t = _toeplitz_s1(w2, Wo)                      # (3, Wo*C, Wo*C)
    w3t = _toeplitz_s1(w3, Wo)                      # (3, Wo*C, Wo*C)
    brow = jnp.concatenate([jnp.tile(b1.reshape(1, C), (1, Wo)),
                            jnp.tile(b2.reshape(1, C), (1, Wo)),
                            jnp.tile(b3.reshape(1, C), (1, Wo))], axis=0)

    # --- scheduling hints (MXU flops incl. Toeplitz structure, HBM bytes) ---
    flops = N * 2 * Ho * WC * (6 * (Wo + 1) * C + 6 * WC)
    bytes_accessed = (planes.size + w1t.size + w2t.size + w3t.size
                      + brow.size + N * Ho * WC) * 4
    cost = pl.CostEstimate(flops=flops, transcendentals=0,
                           bytes_accessed=bytes_accessed)

    # --- VMEM budget from (8,128)-tile-padded sizes (double-buffered blocks) ---
    blocks = [(1, 4, Ho + 1, (Wo + 1) * C),         # parity planes
              (6, (Wo + 1) * C, WC),                # w1t
              (3, WC, WC), (3, WC, WC),             # w2t / w3t
              (3, WC),                              # bias rows
              (1, Ho, WC)]                          # output block
    est = (2 * sum(_tile_padded_bytes(b) for b in blocks)
           + _tile_padded_bytes((Ho + 2, WC))       # apad scratch
           + 8 * _tile_padded_bytes((Ho, WC)))      # live f32 temporaries
    vmem_limit = int(min(max(est + (4 << 20), 16 << 20), 48 << 20))

    out_flat = pl.pallas_call(
        down_sample_kernel,
        out_shape=jax.ShapeDtypeStruct((N, Ho, WC), jnp.float32),
        grid_spec=pltpu.PrefetchScalarGridSpec(
            num_scalar_prefetch=0,
            grid=(N,),
            in_specs=[
                pl.BlockSpec((1, 4, Ho + 1, (Wo + 1) * C),
                             lambda n: (n, 0, 0, 0)),
                pl.BlockSpec((6, (Wo + 1) * C, WC), lambda n: (0, 0, 0)),
                pl.BlockSpec((3, WC, WC), lambda n: (0, 0, 0)),
                pl.BlockSpec((3, WC, WC), lambda n: (0, 0, 0)),
                pl.BlockSpec((3, WC), lambda n: (0, 0)),
            ],
            out_specs=pl.BlockSpec((1, Ho, WC), lambda n: (n, 0, 0)),
            scratch_shapes=[pltpu.VMEM((Ho + 2, WC), jnp.float32)],
        ),
        compiler_params=pltpu.CompilerParams(
            dimension_semantics=("parallel",),
            vmem_limit_bytes=vmem_limit),
        cost_estimate=cost,
    )(planes, w1t, w2t, w3t, brow)

    out = out_flat.reshape(N, Ho, Wo, C)
    return jnp.transpose(out, (0, 3, 1, 2))         # back to NCHW


def _reference(x_nchw, w1, b1, w2, b2, w3, b3):
    """Pure-JAX reference (NHWC convs via lax.conv_general_dilated)."""
    x = jnp.transpose(x_nchw, (0, 2, 3, 1)).astype(jnp.float32)

    def conv(inp, w, b, stride):
        y = jax.lax.conv_general_dilated(
            inp, w, window_strides=(stride, stride),
            padding=((1, 1), (1, 1)),
            dimension_numbers=("NHWC", "HWIO", "NHWC"))
        return y + b.reshape(1, 1, 1, -1)

    c1 = conv(x, w1, b1, 2)
    c2 = conv(jax.nn.relu(c1), w2, b2, 1)
    c3 = conv(jax.nn.relu(c2), w3, b3, 1)
    return jnp.transpose(c3 + c1, (0, 3, 1, 2))


def _init_params(key, channels):
    """Deterministic synthetic parameters (HWIO weights, (1,C) biases)."""
    ks = jax.random.split(key, 6)
    fan_in = channels * 9
    scale = 1.0 / jnp.sqrt(jnp.float32(fan_in))
    w1 = scale * jax.random.normal(ks[0], (3, 3, channels, channels), jnp.float32)
    w2 = scale * jax.random.normal(ks[1], (3, 3, channels, channels), jnp.float32)
    w3 = scale * jax.random.normal(ks[2], (3, 3, channels, channels), jnp.float32)
    b1 = scale * jax.random.normal(ks[3], (1, channels), jnp.float32)
    b2 = scale * jax.random.normal(ks[4], (1, channels), jnp.float32)
    b3 = scale * jax.random.normal(ks[5], (1, channels), jnp.float32)
    return w1, b1, w2, b2, w3, b3


if __name__ == "__main__":
    key = jax.random.PRNGKey(0)
    k_x, k_p = jax.random.split(key)

    N, C, H, W = 2, 4, 16, 16
    x = jax.random.normal(k_x, (N, C, H, W), jnp.float32)   # NCHW, like PyTorch
    params = _init_params(k_p, C)

    out = down_sample_block(x, *params)
    out = jax.block_until_ready(out)

    ref = _reference(x, *params)
    assert out.shape == (N, C, H // 2, W // 2), out.shape
    assert jnp.allclose(out, ref, rtol=1e-4, atol=1e-4), (
        float(jnp.max(jnp.abs(out - ref))))

    print("KERNEL_OK")
</pallas_src>

<mosaic_0001>
module attributes {stable_mosaic.version = 11 : i64} {
  func.func @down_sample_kernel(%arg0: i32, %arg1: memref<1x4x9x36xf32, #tpu.memory_space<vmem>>, %arg2: memref<6x36x32xf32, #tpu.memory_space<vmem>>, %arg3: memref<3x32x32xf32, #tpu.memory_space<vmem>>, %arg4: memref<3x32x32xf32, #tpu.memory_space<vmem>>, %arg5: memref<3x32xf32, #tpu.memory_space<vmem>>, %arg6: memref<1x8x32xf32, #tpu.memory_space<vmem>>, %arg7: memref<10x32xf32, #tpu.memory_space<vmem>>) attributes {dimension_semantics = [#tpu.dimension_semantics<parallel>], iteration_bounds = array<i64: 2>, scalar_prefetch = 0 : i64, scratch_operands = 1 : i64, tpu.core_type = #tpu.core_type<tc>, window_params = [{transform_indices = @transform_0, window_bounds = array<i64: 1, 4, 9, 36>}, {pipeline_mode = #tpu.pipeline_mode<synchronous>, transform_indices = @transform_1, window_bounds = array<i64: 6, 36, 32>}, {pipeline_mode = #tpu.pipeline_mode<synchronous>, transform_indices = @transform_2, window_bounds = array<i64: 3, 32, 32>}, {pipeline_mode = #tpu.pipeline_mode<synchronous>, transform_indices = @transform_3, window_bounds = array<i64: 3, 32, 32>}, {pipeline_mode = #tpu.pipeline_mode<synchronous>, transform_indices = @transform_4, window_bounds = array<i64: 3, 32>}, {transform_indices = @transform_5, window_bounds = array<i64: 1, 8, 32>}]} {
    %c0 = arith.constant 0 : index
    %c0_0 = arith.constant 0 : index
    %c0_1 = arith.constant 0 : index
    %c0_2 = arith.constant 0 : index
    %0 = vector.load %arg1[%c0, %c0_0, %c0_1, %c0_2] : memref<1x4x9x36xf32, #tpu.memory_space<vmem>>, vector<1x4x9x36xf32>
    %1 = vector.shape_cast %0 : vector<1x4x9x36xf32> to vector<4x9x36xf32>
    %2 = vector.extract_strided_slice %1 {offsets = [0, 0, 0], sizes = [1, 8, 36], strides = [1, 1, 1]} : vector<4x9x36xf32> to vector<1x8x36xf32>
    %3 = vector.shape_cast %2 : vector<1x8x36xf32> to vector<8x36xf32>
    %c0_3 = arith.constant 0 : index
    %c0_4 = arith.constant 0 : index
    %c0_5 = arith.constant 0 : index
    %4 = vector.load %arg2[%c0_3, %c0_4, %c0_5] : memref<6x36x32xf32, #tpu.memory_space<vmem>>, vector<1x36x32xf32>
    %5 = vector.shape_cast %4 : vector<1x36x32xf32> to vector<36x32xf32>
    %cst = arith.constant dense<0.000000e+00> : vector<8x32xf32>
    %6 = tpu.matmul %3, %5, %cst {dimension_numbers = #tpu.dot_dimension_numbers<[1], [0], [0], [1], [0, 0, 1, 1], [], []>} : vector<8x36xf32>, vector<36x32xf32>, vector<8x32xf32> -> vector<8x32xf32>
    %7 = vector.extract_strided_slice %1 {offsets = [0, 1, 0], sizes = [1, 8, 36], strides = [1, 1, 1]} : vector<4x9x36xf32> to vector<1x8x36xf32>
    %8 = vector.shape_cast %7 : vector<1x8x36xf32> to vector<8x36xf32>
    %c1 = arith.constant 1 : index
    %c0_6 = arith.constant 0 : index
    %c0_7 = arith.constant 0 : index
    %9 = vector.load %arg2[%c1, %c0_6, %c0_7] : memref<6x36x32xf32, #tpu.memory_space<vmem>>, vector<1x36x32xf32>
    %10 = vector.shape_cast %9 : vector<1x36x32xf32> to vector<36x32xf32>
    %cst_8 = arith.constant dense<0.000000e+00> : vector<8x32xf32>
    %11 = tpu.matmul %8, %10, %cst_8 {dimension_numbers = #tpu.dot_dimension_numbers<[1], [0], [0], [1], [0, 0, 1, 1], [], []>} : vector<8x36xf32>, vector<36x32xf32>, vector<8x32xf32> -> vector<8x32xf32>
    %12 = arith.addf %6, %11 : vector<8x32xf32>
    %13 = vector.extract_strided_slice %1 {offsets = [1, 0, 0], sizes = [1, 8, 36], strides = [1, 1, 1]} : vector<4x9x36xf32> to vector<1x8x36xf32>
    %14 = vector.shape_cast %13 : vector<1x8x36xf32> to vector<8x36xf32>
    %c2 = arith.constant 2 : index
    %c0_9 = arith.constant 0 : index
    %c0_10 = arith.constant 0 : index
    %15 = vector.load %arg2[%c2, %c0_9, %c0_10] : memref<6x36x32xf32, #tpu.memory_space<vmem>>, vector<1x36x32xf32>
    %16 = vector.shape_cast %15 : vector<1x36x32xf32> to vector<36x32xf32>
    %cst_11 = arith.constant dense<0.000000e+00> : vector<8x32xf32>
    %17 = tpu.matmul %14, %16, %cst_11 {dimension_numbers = #tpu.dot_dimension_numbers<[1], [0], [0], [1], [0, 0, 1, 1], [], []>} : vector<8x36xf32>, vector<36x32xf32>, vector<8x32xf32> -> vector<8x32xf32>
    %18 = arith.addf %12, %17 : vector<8x32xf32>
    %19 = vector.extract_strided_slice %1 {offsets = [1, 1, 0], sizes = [1, 8, 36], strides = [1, 1, 1]} : vector<4x9x36xf32> to vector<1x8x36xf32>
    %20 = vector.shape_cast %19 : vector<1x8x36xf32> to vector<8x36xf32>
    %c3 = arith.constant 3 : index
    %c0_12 = arith.constant 0 : index
    %c0_13 = arith.constant 0 : index
    %21 = vector.load %arg2[%c3, %c0_12, %c0_13] : memref<6x36x32xf32, #tpu.memory_space<vmem>>, vector<1x36x32xf32>
    %22 = vector.shape_cast %21 : vector<1x36x32xf32> to vector<36x32xf32>
    %cst_14 = arith.constant dense<0.000000e+00> : vector<8x32xf32>
    %23 = tpu.matmul %20, %22, %cst_14 {dimension_numbers = #tpu.dot_dimension_numbers<[1], [0], [0], [1], [0, 0, 1, 1], [], []>} : vector<8x36xf32>, vector<36x32xf32>, vector<8x32xf32> -> vector<8x32xf32>
    %24 = arith.addf %18, %23 : vector<8x32xf32>
    %25 = vector.extract_strided_slice %1 {offsets = [2, 0, 0], sizes = [1, 8, 36], strides = [1, 1, 1]} : vector<4x9x36xf32> to vector<1x8x36xf32>
    %26 = vector.shape_cast %25 : vector<1x8x36xf32> to vector<8x36xf32>
    %c4 = arith.constant 4 : index
    %c0_15 = arith.constant 0 : index
    %c0_16 = arith.constant 0 : index
    %27 = vector.load %arg2[%c4, %c0_15, %c0_16] : memref<6x36x32xf32, #tpu.memory_space<vmem>>, vector<1x36x32xf32>
    %28 = vector.shape_cast %27 : vector<1x36x32xf32> to vector<36x32xf32>
    %cst_17 = arith.constant dense<0.000000e+00> : vector<8x32xf32>
    %29 = tpu.matmul %26, %28, %cst_17 {dimension_numbers = #tpu.dot_dimension_numbers<[1], [0], [0], [1], [0, 0, 1, 1], [], []>} : vector<8x36xf32>, vector<36x32xf32>, vector<8x32xf32> -> vector<8x32xf32>
    %30 = arith.addf %24, %29 : vector<8x32xf32>
    %31 = vector.extract_strided_slice %1 {offsets = [3, 0, 0], sizes = [1, 8, 36], strides = [1, 1, 1]} : vector<4x9x36xf32> to vector<1x8x36xf32>
    %32 = vector.shape_cast %31 : vector<1x8x36xf32> to vector<8x36xf32>
    %c5 = arith.constant 5 : index
    %c0_18 = arith.constant 0 : index
    %c0_19 = arith.constant 0 : index
    %33 = vector.load %arg2[%c5, %c0_18, %c0_19] : memref<6x36x32xf32, #tpu.memory_space<vmem>>, vector<1x36x32xf32>
    %34 = vector.shape_cast %33 : vector<1x36x32xf32> to vector<36x32xf32>
    %cst_20 = arith.constant dense<0.000000e+00> : vector<8x32xf32>
    %35 = tpu.matmul %32, %34, %cst_20 {dimension_numbers = #tpu.dot_dimension_numbers<[1], [0], [0], [1], [0, 0, 1, 1], [], []>} : vector<8x36xf32>, vector<36x32xf32>, vector<8x32xf32> -> vector<8x32xf32>
    %36 = arith.addf %30, %35 : vector<8x32xf32>
    %c0_21 = arith.constant 0 : index
    %c0_22 = arith.constant 0 : index
    %37 = vector.load %arg5[%c0_21, %c0_22] : memref<3x32xf32, #tpu.memory_space<vmem>>, vector<1x32xf32>
    %38 = vector.broadcast %37 : vector<1x32xf32> to vector<8x32xf32>
    %39 = arith.addf %36, %38 : vector<8x32xf32>
    %cst_23 = arith.constant 0.000000e+00 : f32
    %40 = vector.broadcast %cst_23 : f32 to vector<1x32xf32>
    %c0_24 = arith.constant 0 : index
    %c0_25 = arith.constant 0 : index
    %41 = vector.load %arg7[%c0_24, %c0_25] : memref<10x32xf32, #tpu.memory_space<vmem>>, vector<1x32xf32>
    tpu.vector_store %arg7[%c0_24, %c0_25], %40 {strides = array<i32>} : memref<10x32xf32, #tpu.memory_space<vmem>>, vector<1x32xf32>,
    %c9 = arith.constant 9 : index
    %c0_26 = arith.constant 0 : index
    %42 = vector.load %arg7[%c9, %c0_26] : memref<10x32xf32, #tpu.memory_space<vmem>>, vector<1x32xf32>
    tpu.vector_store %arg7[%c9, %c0_26], %40 {strides = array<i32>} : memref<10x32xf32, #tpu.memory_space<vmem>>, vector<1x32xf32>,
    %cst_27 = arith.constant 0.000000e+00 : f32
    %43 = vector.broadcast %cst_27 : f32 to vector<8x32xf32>
    %44 = arith.maximumf %39, %43 : vector<8x32xf32>
    %c1_28 = arith.constant 1 : index
    %c0_29 = arith.constant 0 : index
    %45 = vector.load %arg7[%c1_28, %c0_29] : memref<10x32xf32, #tpu.memory_space<vmem>>, vector<8x32xf32>
    tpu.vector_store %arg7[%c1_28, %c0_29], %44 {strides = array<i32>} : memref<10x32xf32, #tpu.memory_space<vmem>>, vector<8x32xf32>,
    %c0_30 = arith.constant 0 : index
    %c0_31 = arith.constant 0 : index
    %46 = vector.load %arg7[%c0_30, %c0_31] : memref<10x32xf32, #tpu.memory_space<vmem>>, vector<8x32xf32>
    %c0_32 = arith.constant 0 : index
    %c0_33 = arith.constant 0 : index
    %c0_34 = arith.constant 0 : index
    %47 = vector.load %arg3[%c0_32, %c0_33, %c0_34] : memref<3x32x32xf32, #tpu.memory_space<vmem>>, vector<1x32x32xf32>
    %48 = vector.shape_cast %47 : vector<1x32x32xf32> to vector<32x32xf32>
    %cst_35 = arith.constant dense<0.000000e+00> : vector<8x32xf32>
    %49 = tpu.matmul %46, %48, %cst_35 {dimension_numbers = #tpu.dot_dimension_numbers<[1], [0], [0], [1], [0, 0, 1, 1], [], []>} : vector<8x32xf32>, vector<32x32xf32>, vector<8x32xf32> -> vector<8x32xf32>
    %c1_36 = arith.constant 1 : index
    %c0_37 = arith.constant 0 : index
    %50 = vector.load %arg7[%c1_36, %c0_37] : memref<10x32xf32, #tpu.memory_space<vmem>>, vector<8x32xf32>
    %c1_38 = arith.constant 1 : index
    %c0_39 = arith.constant 0 : index
    %c0_40 = arith.constant 0 : index
    %51 = vector.load %arg3[%c1_38, %c0_39, %c0_40] : memref<3x32x32xf32, #tpu.memory_space<vmem>>, vector<1x32x32xf32>
    %52 = vector.shape_cast %51 : vector<1x32x32xf32> to vector<32x32xf32>
    %cst_41 = arith.constant dense<0.000000e+00> : vector<8x32xf32>
    %53 = tpu.matmul %50, %52, %cst_41 {dimension_numbers = #tpu.dot_dimension_numbers<[1], [0], [0], [1], [0, 0, 1, 1], [], []>} : vector<8x32xf32>, vector<32x32xf32>, vector<8x32xf32> -> vector<8x32xf32>
    %54 = arith.addf %49, %53 : vector<8x32xf32>
    %c2_42 = arith.constant 2 : index
    %c0_43 = arith.constant 0 : index
    %55 = vector.load %arg7[%c2_42, %c0_43] : memref<10x32xf32, #tpu.memory_space<vmem>>, vector<8x32xf32>
    %c2_44 = arith.constant 2 : index
    %c0_45 = arith.constant 0 : index
    %c0_46 = arith.constant 0 : index
    %56 = vector.load %arg3[%c2_44, %c0_45, %c0_46] : memref<3x32x32xf32, #tpu.memory_space<vmem>>, vector<1x32x32xf32>
    %57 = vector.shape_cast %56 : vector<1x32x32xf32> to vector<32x32xf32>
    %cst_47 = arith.constant dense<0.000000e+00> : vector<8x32xf32>
    %58 = tpu.matmul %55, %57, %cst_47 {dimension_numbers = #tpu.dot_dimension_numbers<[1], [0], [0], [1], [0, 0, 1, 1], [], []>} : vector<8x32xf32>, vector<32x32xf32>, vector<8x32xf32> -> vector<8x32xf32>
    %59 = arith.addf %54, %58 : vector<8x32xf32>
    %c1_48 = arith.constant 1 : index
    %c0_49 = arith.constant 0 : index
    %60 = vector.load %arg5[%c1_48, %c0_49] : memref<3x32xf32, #tpu.memory_space<vmem>>, vector<1x32xf32>
    %61 = vector.broadcast %60 : vector<1x32xf32> to vector<8x32xf32>
    %62 = arith.addf %59, %61 : vector<8x32xf32>
    %cst_50 = arith.constant 0.000000e+00 : f32
    %63 = vector.broadcast %cst_50 : f32 to vector<8x32xf32>
    %64 = arith.maximumf %62, %63 : vector<8x32xf32>
    %c1_51 = arith.constant 1 : index
    %c0_52 = arith.constant 0 : index
    %65 = vector.load %arg7[%c1_51, %c0_52] : memref<10x32xf32, #tpu.memory_space<vmem>>, vector<8x32xf32>
    tpu.vector_store %arg7[%c1_51, %c0_52], %64 {strides = array<i32>} : memref<10x32xf32, #tpu.memory_space<vmem>>, vector<8x32xf32>,
    %c0_53 = arith.constant 0 : index
    %c0_54 = arith.constant 0 : index
    %66 = vector.load %arg7[%c0_53, %c0_54] : memref<10x32xf32, #tpu.memory_space<vmem>>, vector<8x32xf32>
    %c0_55 = arith.constant 0 : index
    %c0_56 = arith.constant 0 : index
    %c0_57 = arith.constant 0 : index
    %67 = vector.load %arg4[%c0_55, %c0_56, %c0_57] : memref<3x32x32xf32, #tpu.memory_space<vmem>>, vector<1x32x32xf32>
    %68 = vector.shape_cast %67 : vector<1x32x32xf32> to vector<32x32xf32>
    %cst_58 = arith.constant dense<0.000000e+00> : vector<8x32xf32>
    %69 = tpu.matmul %66, %68, %cst_58 {dimension_numbers = #tpu.dot_dimension_numbers<[1], [0], [0], [1], [0, 0, 1, 1], [], []>} : vector<8x32xf32>, vector<32x32xf32>, vector<8x32xf32> -> vector<8x32xf32>
    %c1_59 = arith.constant 1 : index
    %c0_60 = arith.constant 0 : index
    %70 = vector.load %arg7[%c1_59, %c0_60] : memref<10x32xf32, #tpu.memory_space<vmem>>, vector<8x32xf32>
    %c1_61 = arith.constant 1 : index
    %c0_62 = arith.constant 0 : index
    %c0_63 = arith.constant 0 : index
    %71 = vector.load %arg4[%c1_61, %c0_62, %c0_63] : memref<3x32x32xf32, #tpu.memory_space<vmem>>, vector<1x32x32xf32>
    %72 = vector.shape_cast %71 : vector<1x32x32xf32> to vector<32x32xf32>
    %cst_64 = arith.constant dense<0.000000e+00> : vector<8x32xf32>
    %73 = tpu.matmul %70, %72, %cst_64 {dimension_numbers = #tpu.dot_dimension_numbers<[1], [0], [0], [1], [0, 0, 1, 1], [], []>} : vector<8x32xf32>, vector<32x32xf32>, vector<8x32xf32> -> vector<8x32xf32>
    %74 = arith.addf %69, %73 : vector<8x32xf32>
    %c2_65 = arith.constant 2 : index
    %c0_66 = arith.constant 0 : index
    %75 = vector.load %arg7[%c2_65, %c0_66] : memref<10x32xf32, #tpu.memory_space<vmem>>, vector<8x32xf32>
    %c2_67 = arith.constant 2 : index
    %c0_68 = arith.constant 0 : index
    %c0_69 = arith.constant 0 : index
    %76 = vector.load %arg4[%c2_67, %c0_68, %c0_69] : memref<3x32x32xf32, #tpu.memory_space<vmem>>, vector<1x32x32xf32>
    %77 = vector.shape_cast %76 : vector<1x32x32xf32> to vector<32x32xf32>
    %cst_70 = arith.constant dense<0.000000e+00> : vector<8x32xf32>
    %78 = tpu.matmul %75, %77, %cst_70 {dimension_numbers = #tpu.dot_dimension_numbers<[1], [0], [0], [1], [0, 0, 1, 1], [], []>} : vector<8x32xf32>, vector<32x32xf32>, vector<8x32xf32> -> vector<8x32xf32>
    %79 = arith.addf %74, %78 : vector<8x32xf32>
    %c2_71 = arith.constant 2 : index
    %c0_72 = arith.constant 0 : index
    %80 = vector.load %arg5[%c2_71, %c0_72] : memref<3x32xf32, #tpu.memory_space<vmem>>, vector<1x32xf32>
    %81 = vector.broadcast %80 : vector<1x32xf32> to vector<8x32xf32>
    %82 = arith.addf %79, %81 : vector<8x32xf32>
    %83 = arith.addf %39, %82 : vector<8x32xf32>
    %c0_73 = arith.constant 0 : index
    %c0_74 = arith.constant 0 : index
    %c0_75 = arith.constant 0 : index
    %84 = vector.load %arg6[%c0_73, %c0_74, %c0_75] : memref<1x8x32xf32, #tpu.memory_space<vmem>>, vector<1x8x32xf32>
    %85 = vector.shape_cast %84 : vector<1x8x32xf32> to vector<8x32xf32>
    %86 = vector.shape_cast %83 : vector<8x32xf32> to vector<1x8x32xf32>
    tpu.vector_store %arg6[%c0_73, %c0_74, %c0_75], %86 {strides = array<i32>} : memref<1x8x32xf32, #tpu.memory_space<vmem>>, vector<1x8x32xf32>,
    return
  }
  func.func @transform_0(%arg0: i32) -> (i32, i32, i32, i32) {
    %c0_i32 = arith.constant 0 : i32
    %c0_i32_0 = arith.constant 0 : i32
    %c0_i32_1 = arith.constant 0 : i32
    %c0_i32_2 = arith.constant 0 : i32
    return %arg0, %c0_i32, %c0_i32_0, %c0_i32_1 : i32, i32, i32, i32
  }
  func.func @transform_1(%arg0: i32) -> (i32, i32, i32) {
    %c0_i32 = arith.constant 0 : i32
    %c0_i32_0 = arith.constant 0 : i32
    %c0_i32_1 = arith.constant 0 : i32
    %c0_i32_2 = arith.constant 0 : i32
    return %c0_i32, %c0_i32_0, %c0_i32_1 : i32, i32, i32
  }
  func.func @transform_2(%arg0: i32) -> (i32, i32, i32) {
    %c0_i32 = arith.constant 0 : i32
    %c0_i32_0 = arith.constant 0 : i32
    %c0_i32_1 = arith.constant 0 : i32
    %c0_i32_2 = arith.constant 0 : i32
    return %c0_i32, %c0_i32_0, %c0_i32_1 : i32, i32, i32
  }
  func.func @transform_3(%arg0: i32) -> (i32, i32, i32) {
    %c0_i32 = arith.constant 0 : i32
    %c0_i32_0 = arith.constant 0 : i32
    %c0_i32_1 = arith.constant 0 : i32
    %c0_i32_2 = arith.constant 0 : i32
    return %c0_i32, %c0_i32_0, %c0_i32_1 : i32, i32, i32
  }
  func.func @transform_4(%arg0: i32) -> (i32, i32) {
    %c0_i32 = arith.constant 0 : i32
    %c0_i32_0 = arith.constant 0 : i32
    %c0_i32_1 = arith.constant 0 : i32
    return %c0_i32, %c0_i32_0 : i32, i32
  }
  func.func @transform_5(%arg0: i32) -> (i32, i32, i32) {
    %c0_i32 = arith.constant 0 : i32
    %c0_i32_0 = arith.constant 0 : i32
    %c0_i32_1 = arith.constant 0 : i32
    return %arg0, %c0_i32, %c0_i32_0 : i32, i32, i32
  }
}

</mosaic_0001>

<llo_original>
// kernel: down_sample_block.1
$region0: #{down_sample_block.1}
  #allocation0 [shape = 'u32[]', space=smem, size = 0x4, offset = 0x4, fixed_abs, tag = 'smem constant byte address 0x4 - core index']
  #allocation1 [shape = 'u32[144,128]{1,0:T(1,128)}', space=vmem, size = 0x12000, scoped, tag = 'internal scratch']
  #allocation2 [shape = 'f32[10,32]{1,0:T(8,128)}', space=vmem, size = 0x2000, scoped, tag = 'scratch operand']
  %s0 = inlined_call_operand.vmem [shape: f32[2,4,9,36], index: 0, kind: input, shape index: {}]
  %s1 = inlined_call_operand.vmem [shape: f32[6,36,32], index: 1, kind: input, shape index: {}]
  %s2 = inlined_call_operand.vmem [shape: f32[3,32,32], index: 2, kind: input, shape index: {}]
  %s3 = inlined_call_operand.vmem [shape: f32[3,32,32], index: 3, kind: input, shape index: {}]
  %s4 = inlined_call_operand.vmem [shape: f32[3,32], index: 4, kind: input, shape index: {}]
  %s5 = inlined_call_operand.vmem [shape: f32[2,8,32], index: 5, kind: output, shape index: {}]
  %s6 = sld [smem:[#allocation0]]
  $region53: #{down_sample_block.1} parent=0
    _
  %s8 = ssub.s32 1, %s6
  %s9 = scalar_select 0, %s8, %s6
  loop: start=0, step=1, limit=4
  $region2: #{down_sample_block.1} parent=0 // loop_pre_header
    _
  $region3: #{down_sample_block.1} parent=0 // loop_header
    %s11 = sphi 0, %s15
    %p12 = scmp.ge.s32.totalorder %s11, 4
    %s21 = sphi 0, %s23
    %s24 = sphi 0, %s21
    %s25 = sphi 0, %s24
    %s41 = sphi 0, %s25
    %s45 = sphi 0, %s45
    %s47 = sphi 0, %s45
    %s48 = sphi 0, %s47
    %s62 = sphi 0, %s48
    %s66 = sphi 0, %s66
    %s68 = sphi 0, %s66
    %s69 = sphi 0, %s68
    %s83 = sphi 0, %s69
    %s87 = sphi 0, %s87
    %s89 = sphi 0, %s87
    %s90 = sphi 0, %s89
    %s104 = sphi 0, %s90
    %s108 = sphi 0, %s108
    %s110 = sphi 0, %s108
    %s111 = sphi 0, %s110
    %s125 = sphi 0, %s111
    %s131 = sphi 0, %s133
    %s134 = sphi 0, %s131
    %s135 = sphi 0, %s134
    %s151 = sphi 0, %s135
  $region4: #{down_sample_block.1} parent=0 // loop_header_branch
    %14 = sbr.rel (%p12) target = $region8
  $region5: #{down_sample_block.1} parent=0 // loop_body
    %s16 = ssub.s32 %s11, 1
    %s17 = ssub.s32 %s11, 2
    %s18 = sadd.s32 %s11, 1
    %s19 = ssub.s32 %s11, %s18
    %p20 = scmp.eq.s32.totalorder %s19, 0
    %s22 = sadd.s32 %s21, 1
    %s23 = scalar_select %p20, %s21, %s22
    %p26 = pneg %p20
    %p27 = scmp.eq.s32.totalorder %s11, 1
    %p28 = por %p26, %p27
    %p29 = scmp.ne.s32.totalorder %s21, %s24
    %p30 = scmp.eq.s32.totalorder %s11, 0
    %p31 = por %p29, %p30
    %p32 = scmp.ne.s32.totalorder %s21, %s24
    %p33 = scmp.eq.s32.totalorder %s16, 1
    %p34 = por %p32, %p33
    %p35 = scmp.ne.s32.totalorder %s24, %s25
    %p36 = scmp.eq.s32.totalorder %s16, 0
    %p37 = por %p35, %p36
    %p38 = scmp.ne.s32.totalorder %s24, %s25
    %p39 = scmp.eq.s32.totalorder %s17, 1
    %p40 = por %p38, %p39
    %p42 = scmp.ne.s32.totalorder %s25, %s41
    %p43 = scmp.eq.s32.totalorder %s17, 0
    %p44 = por %p42, %p43
    %s46 = sadd.s32 %s45, 1
    %p49 = scmp.eq.s32.totalorder %s11, 1
    %p50 = scmp.ne.s32.totalorder %s45, %s47
    %p51 = scmp.eq.s32.totalorder %s11, 0
    %p52 = por %p50, %p51
    %p53 = scmp.ne.s32.totalorder %s45, %s47
    %p54 = scmp.eq.s32.totalorder %s16, 1
    %p55 = por %p53, %p54
    %p56 = scmp.ne.s32.totalorder %s47, %s48
    %p57 = scmp.eq.s32.totalorder %s16, 0
    %p58 = por %p56, %p57
    %p59 = scmp.ne.s32.totalorder %s47, %s48
    %p60 = scmp.eq.s32.totalorder %s17, 1
    %p61 = por %p59, %p60
    %p63 = scmp.ne.s32.totalorder %s48, %s62
    %p64 = scmp.eq.s32.totalorder %s17, 0
    %p65 = por %p63, %p64
    %s67 = sadd.s32 %s66, 1
    %p70 = scmp.eq.s32.totalorder %s11, 1
    %p71 = scmp.ne.s32.totalorder %s66, %s68
    %p72 = scmp.eq.s32.totalorder %s11, 0
    %p73 = por %p71, %p72
    %p74 = scmp.ne.s32.totalorder %s66, %s68
    %p75 = scmp.eq.s32.totalorder %s16, 1
    %p76 = por %p74, %p75
    %p77 = scmp.ne.s32.totalorder %s68, %s69
    %p78 = scmp.eq.s32.totalorder %s16, 0
    %p79 = por %p77, %p78
    %p80 = scmp.ne.s32.totalorder %s68, %s69
    %p81 = scmp.eq.s32.totalorder %s17, 1
    %p82 = por %p80, %p81
    %p84 = scmp.ne.s32.totalorder %s69, %s83
    %p85 = scmp.eq.s32.totalorder %s17, 0
    %p86 = por %p84, %p85
    %s88 = sadd.s32 %s87, 1
    %p91 = scmp.eq.s32.totalorder %s11, 1
    %p92 = scmp.ne.s32.totalorder %s87, %s89
    %p93 = scmp.eq.s32.totalorder %s11, 0
    %p94 = por %p92, %p93
    %p95 = scmp.ne.s32.totalorder %s87, %s89
    %p96 = scmp.eq.s32.totalorder %s16, 1
    %p97 = por %p95, %p96
    %p98 = scmp.ne.s32.totalorder %s89, %s90
    %p99 = scmp.eq.s32.totalorder %s16, 0
    %p100 = por %p98, %p99
    %p101 = scmp.ne.s32.totalorder %s89, %s90
    %p102 = scmp.eq.s32.totalorder %s17, 1
    %p103 = por %p101, %p102
    %p105 = scmp.ne.s32.totalorder %s90, %s104
    %p106 = scmp.eq.s32.totalorder %s17, 0
    %p107 = por %p105, %p106
    %s109 = sadd.s32 %s108, 1
    %p112 = scmp.eq.s32.totalorder %s11, 1
    %p113 = scmp.ne.s32.totalorder %s108, %s110
    %p114 = scmp.eq.s32.totalorder %s11, 0
    %p115 = por %p113, %p114
    %p116 = scmp.ne.s32.totalorder %s108, %s110
    %p117 = scmp.eq.s32.totalorder %s16, 1
    %p118 = por %p116, %p117
    %p119 = scmp.ne.s32.totalorder %s110, %s111
    %p120 = scmp.eq.s32.totalorder %s16, 0
    %p121 = por %p119, %p120
    %p122 = scmp.ne.s32.totalorder %s110, %s111
    %p123 = scmp.eq.s32.totalorder %s17, 1
    %p124 = por %p122, %p123
    %p126 = scmp.ne.s32.totalorder %s111, %s125
    %p127 = scmp.eq.s32.totalorder %s17, 0
    %p128 = por %p126, %p127
    %s129 = ssub.s32 %s11, %s18
    %p130 = scmp.eq.s32.totalorder %s129, 0
    %s132 = sadd.s32 %s131, 1
    %s133 = scalar_select %p130, %s131, %s132
    %p136 = pneg %p130
    %p137 = scmp.eq.s32.totalorder %s11, 1
    %p138 = por %p136, %p137
    %p139 = scmp.ne.s32.totalorder %s131, %s134
    %p140 = scmp.eq.s32.totalorder %s11, 0
    %p141 = por %p139, %p140
    %p142 = scmp.ne.s32.totalorder %s131, %s134
    %p143 = scmp.eq.s32.totalorder %s16, 1
    %p144 = por %p142, %p143
    %p145 = scmp.ne.s32.totalorder %s134, %s135
    %p146 = scmp.eq.s32.totalorder %s16, 0
    %p147 = por %p145, %p146
    %p148 = scmp.ne.s32.totalorder %s134, %s135
    %p149 = scmp.eq.s32.totalorder %s17, 1
    %p150 = por %p148, %p149
    %p152 = scmp.ne.s32.totalorder %s135, %s151
    %p153 = scmp.eq.s32.totalorder %s17, 0
    %p154 = por %p152, %p153
    %p155 = scmp.le.s32.totalorder 1, %s11
    %p156 = scmp.lt.s32.totalorder %s11, 3
    %p157 = pnand %p155, %p156
    %p158 = pneg %p157
    // Predicated region
    $region9: #{down_sample_block.1} parent=5 // pred_check
      _
    $region10: #{down_sample_block.1} parent=5 // pred_check_branch
      %160 = sbr.rel (%p157) target = $region12
    $region11: #{down_sample_block.1} parent=5 // pred_region
      %s161 = ssub.s32 %s11, 1
      // Predicated region
      $region13: #{down_sample_block.1} parent=11 // pred_check
        %p162 = pneg %p58
      $region14: #{down_sample_block.1} parent=11 // pred_check_branch
        %164 = sbr.rel (%p162) target = $region16
      $region15: #{down_sample_block.1} parent=11 // pred_region
        _
      $region16: #{down_sample_block.1} parent=11 // pred_fallthru
        _
      // Predicated region
      $region17: #{down_sample_block.1} parent=11 // pred_check
        %p165 = pneg %p79
      $region18: #{down_sample_block.1} parent=11 // pred_check_branch
        %167 = sbr.rel (%p165) target = $region20
      $region19: #{down_sample_block.1} parent=11 // pred_region
        _
      $region20: #{down_sample_block.1} parent=11 // pred_fallthru
        _
      // Predicated region
      $region21: #{down_sample_block.1} parent=11 // pred_check
        %p168 = pneg %p100
      $region22: #{down_sample_block.1} parent=11 // pred_check_branch
        %170 = sbr.rel (%p168) target = $region24
      $region23: #{down_sample_block.1} parent=11 // pred_region
        _
      $region24: #{down_sample_block.1} parent=11 // pred_fallthru
        _
      // Predicated region
      $region25: #{down_sample_block.1} parent=11 // pred_check
        %p171 = pneg %p121
      $region26: #{down_sample_block.1} parent=11 // pred_check_branch
        %173 = sbr.rel (%p171) target = $region28
      $region27: #{down_sample_block.1} parent=11 // pred_region
        _
      $region28: #{down_sample_block.1} parent=11 // pred_fallthru
        _
    $region12: #{down_sample_block.1} parent=5 // pred_fallthru
      _
    %p174 = scmp.lt.s32.totalorder %s11, 2
    // Predicated region
    $region29: #{down_sample_block.1} parent=5 // pred_check
      %p175 = pneg %p174
    $region30: #{down_sample_block.1} parent=5 // pred_check_branch
      %177 = sbr.rel (%p175) target = $region32
    $region31: #{down_sample_block.1} parent=5 // pred_region
      // Predicated region
      $region33: #{down_sample_block.1} parent=31 // pred_check
        %p178 = pneg %p31
      $region34: #{down_sample_block.1} parent=31 // pred_check_branch
        %180 = sbr.rel (%p178) target = $region36
      $region35: #{down_sample_block.1} parent=31 // pred_region
        %p181 = scmp.lt.s32.totalorder %s11, 1
        %s182 = scalar_select %p181, %s11, 1
        %s183 = smul.addr %s182, 8
        %s184 = smul.addr %s183, 8
        %s185 = scalar_lea.vmem %s0, %s184
      $region36: #{down_sample_block.1} parent=31 // pred_fallthru
        _
    $region32: #{down_sample_block.1} parent=5 // pred_fallthru
      _
    %p186 = scmp.le.s32.totalorder 1, %s11
    %p187 = scmp.lt.s32.totalorder %s11, 3
    %p188 = pnand %p186, %p187
    %p189 = pneg %p188
    // Predicated region
    $region37: #{down_sample_block.1} parent=5 // pred_check
      _
    $region38: #{down_sample_block.1} parent=5 // pred_check_branch
      %191 = sbr.rel (%p188) target = $region40
    $region39: #{down_sample_block.1} parent=5 // pred_region
      %s192 = ssub.s32 %s11, 1
      %p193 = scmp.lt.s32.totalorder %s16, 1
      %s194 = scalar_select %p193, %s16, 1
      %s195 = smul.addr %s194, 8
      %s196 = smul.addr %s195, 8
      %s197 = scalar_lea.vmem %s0, %s196
      %p198 = pneg %p37
      %p199 = pneg %p34
      %p200 = pneg %p58
      %p201 = pneg %p55
      %p202 = pneg %p79
      %p203 = pneg %p76
      %p204 = pneg %p100
      %p205 = pneg %p97
      %p206 = pneg %p121
      %p207 = pneg %p118
      %p208 = pneg %p147
      %p209 = pneg %p144
      %p210 = scmp.lt.s32.totalorder %s16, 1
      %s211 = scalar_select %p210, %s16, 1
      %s212 = smul.addr %s211, 8
      %s213 = scalar_lea.vmem %s5, %s212
      %p214 = scmp.lt.s32.totalorder %s16, 1
      %s215 = scalar_select %p214, %s16, 1
      %s216 = smul.addr %s215, 8
      %s217 = smul.addr %s216, 8
      %s218 = scalar_lea.vmem %s0, %s217
      %p219 = scmp.lt.s32.totalorder %s16, 1
      %s220 = scalar_select %p219, %s16, 1
      %s221 = smul.addr %s220, 8
      %s222 = scalar_lea.vmem %s5, %s221
      %v223 = vld [vmem:[%s218] sm:$0xff]
      %v224 = vld [vmem:[%s218 + $0x8] sm:$0x1]
      %v225 = vld [vmem:[%s218 + $0x10] sm:$0xff]
      %v226 = vld [vmem:[%s218 + $0x18] sm:$0x1]
      %v227 = vld [vmem:[%s218 + $0x20] sm:$0xff]
      %v228 = vld [vmem:[%s218 + $0x30] sm:$0xff]
      %v229 = vld [vmem:[%s1] sm:$0xff]
      %v230 = vld [vmem:[%s1 + $0x8] sm:$0xff]
      %v231 = vld [vmem:[%s1 + $0x10] sm:$0xff]
      %v232 = vld [vmem:[%s1 + $0x18] sm:$0xff]
      %v233 = vld [vmem:[%s1 + $0x20] sm:$0xf]
      %s234 = scalar_lea.vmem %s1, 40
      %v235 = vld [vmem:[%s234] sm:$0xff]
      %v236 = vld [vmem:[%s234 + $0x8] sm:$0xff]
      %v237 = vld [vmem:[%s234 + $0x10] sm:$0xff]
      %v238 = vld [vmem:[%s234 + $0x18] sm:$0xff]
      %v239 = vld [vmem:[%s234 + $0x20] sm:$0xf]
      %vm242 = vcmask 1046528
      %v243 = vrot.slane %v223, 1
      %v244 = vrot.slane %v224, 1
      %v245 = vsel %vm242, %v243, %v244
      %vm246 = vcmask 293888
      %v247 = vsel %vm246, %v245, 0
      %vm249 = vcmask 1043456
      %v251 = vsel %vm249, %v239, 0
      %253 = vmatprep.subr.mxu0 0.0
      %254 = vmatpush1.msra.mxu0 %v235
      %255 = vmatprep.subr.mxu0 0.0
      %256 = vmatpush1.msra.mxu0 %v236
      %257 = vmatprep.subr.mxu0 0.0
      %258 = vmatpush1.msra.mxu0 %v237
      %259 = vmatprep.subr.mxu0 0.0
      %260 = vmatpush1.msra.mxu0 %v238
      %261 = vmatprep.subr.mxu0 0.0
      %262 = vmatpush1.msra.mxu0 %v251
      %263 = vmatprep.subr.mxu0 0.0
      %264 = vmatpush1.msra.mxu0 0.0
      %265 = vmatprep.subr.mxu0 0.0
      %266 = vmatpush1.msra.mxu0 0.0
      %267 = vmatprep.subr.mxu0 0.0
      %268 = vmatpush1.msra.mxu0 0.0
      %269 = vmatprep.subr.mxu0 0.0
      %270 = vmatpush1.msra.mxu0 0.0
      %271 = vmatprep.subr.mxu0 0.0
      %272 = vmatpush1.msra.mxu0 0.0
      %273 = vmatprep.subr.mxu0 0.0
      %274 = vmatpush1.msra.mxu0 0.0
      %275 = vmatprep.subr.mxu0 0.0
      %276 = vmatpush1.msra.mxu0 0.0
      %277 = vmatprep.subr.mxu0 0.0
      %278 = vmatpush1.msra.mxu0 0.0
      %279 = vmatprep.subr.mxu0 0.0
      %280 = vmatpush1.msra.mxu0 0.0
      %281 = vmatprep.subr.mxu0 0.0
      %282 = vmatpush1.msra.mxu0 0.0
      %283 = vmatprep.subr.mxu0 0.0
      %284 = vmatpush1.msra.mxu0 0.0
      %285 = vmatprep.subr.mxu0 0.0
      %286 = vmatpush1.msra.mxu0 0.0
      %287 = vmatprep.subr.mxu0 0.0
      %288 = vmatpush1.msra.mxu0 0.0
      %289 = vmatprep.subr.mxu0 0.0
      %290 = vmatpush1.msra.mxu0 0.0
      %291 = vmatprep.subr.mxu0 0.0
      %292 = vmatpush1.msra.mxu0 0.0
      %293 = vmatprep.subr.mxu0 0.0
      %294 = vmatpush1.msra.mxu0 0.0
      %295 = vmatprep.subr.mxu0 0.0
      %296 = vmatpush1.msra.mxu0 0.0
      %297 = vmatprep.subr.mxu0 0.0
      %298 = vmatpush1.msra.mxu0 0.0
      %299 = vmatprep.subr.mxu0 0.0
      %300 = vmatpush1.msra.mxu0 0.0
      %301 = vmatprep.subr.mxu0 0.0
      %302 = vmatpush1.msra.mxu0 0.0
      %303 = vmatprep.subr.mxu0 0.0
      %304 = vmatpush1.msra.mxu0 0.0
      %305 = vmatprep.subr.mxu0 0.0
      %306 = vmatpush1.msra.mxu0 0.0
      %307 = vmatprep.subr.mxu0 0.0
      %308 = vmatpush1.msra.mxu0 0.0
      %309 = vmatprep.subr.mxu0 0.0
      %310 = vmatpush1.msra.mxu0 0.0
      %311 = vmatprep.subr.mxu0 0.0
      %312 = vmatpush1.msra.mxu0 0.0
      %313 = vmatprep.subr.mxu0 0.0
      %314 = vmatpush1.msra.mxu0 0.0
      %315 = vmatprep.subr.mxu0 0.0
      %316 = vmatpush1.msra.mxu0 0.0
      %317 = vmatprep.mubr.f32.mxu0 0.0
      %318 = vmatmul.mubr.f32.gmra.mrb[0].mxu0 %v247
      %v319 = vpop.f32.mrb[0].mxu0
      %v320 = vadd.f32 0.0, %v319
      %v321 = vpop.f32.mrb[0].mxu0
      %322 = vdwg.mxu0
      %v323 = vsel %vm246, %v223, 0
      %v326 = vsel %vm249, %v233, 0
      %328 = vmatprep.subr.mxu0 0.0
      %329 = vmatpush1.msra.mxu0 %v229
      %330 = vmatprep.subr.mxu0 0.0
      %331 = vmatpush1.msra.mxu0 %v230
      %332 = vmatprep.subr.mxu0 0.0
      %333 = vmatpush1.msra.mxu0 %v231
      %334 = vmatprep.subr.mxu0 0.0
      %335 = vmatpush1.msra.mxu0 %v232
      %336 = vmatprep.subr.mxu0 0.0
      %337 = vmatpush1.msra.mxu0 %v326
      %338 = vmatprep.subr.mxu0 0.0
      %339 = vmatpush1.msra.mxu0 0.0
      %340 = vmatprep.subr.mxu0 0.0
      %341 = vmatpush1.msra.mxu0 0.0
      %342 = vmatprep.subr.mxu0 0.0
      %343 = vmatpush1.msra.mxu0 0.0
      %344 = vmatprep.subr.mxu0 0.0
      %345 = vmatpush1.msra.mxu0 0.0
      %346 = vmatprep.subr.mxu0 0.0
      %347 = vmatpush1.msra.mxu0 0.0
      %348 = vmatprep.subr.mxu0 0.0
      %349 = vmatpush1.msra.mxu0 0.0
      %350 = vmatprep.subr.mxu0 0.0
      %351 = vmatpush1.msra.mxu0 0.0
      %352 = vmatprep.subr.mxu0 0.0
      %353 = vmatpush1.msra.mxu0 0.0
      %354 = vmatprep.subr.mxu0 0.0
      %355 = vmatpush1.msra.mxu0 0.0
      %356 = vmatprep.subr.mxu0 0.0
      %357 = vmatpush1.msra.mxu0 0.0
      %358 = vmatprep.subr.mxu0 0.0
      %359 = vmatpush1.msra.mxu0 0.0
      %360 = vmatprep.subr.mxu0 0.0
      %361 = vmatpush1.msra.mxu0 0.0
      %362 = vmatprep.subr.mxu0 0.0
      %363 = vmatpush1.msra.mxu0 0.0
      %364 = vmatprep.subr.mxu0 0.0
      %365 = vmatpush1.msra.mxu0 0.0
      %366 = vmatprep.subr.mxu0 0.0
      %367 = vmatpush1.msra.mxu0 0.0
      %368 = vmatprep.subr.mxu0 0.0
      %369 = vmatpush1.msra.mxu0 0.0
      %370 = vmatprep.subr.mxu0 0.0
      %371 = vmatpush1.msra.mxu0 0.0
      %372 = vmatprep.subr.mxu0 0.0
      %373 = vmatpush1.msra.mxu0 0.0
      %374 = vmatprep.subr.mxu0 0.0
      %375 = vmatpush1.msra.mxu0 0.0
      %376 = vmatprep.subr.mxu0 0.0
      %377 = vmatpush1.msra.mxu0 0.0
      %378 = vmatprep.subr.mxu0 0.0
      %379 = vmatpush1.msra.mxu0 0.0
      %380 = vmatprep.subr.mxu0 0.0
      %381 = vmatpush1.msra.mxu0 0.0
      %382 = vmatprep.subr.mxu0 0.0
      %383 = vmatpush1.msra.mxu0 0.0
      %384 = vmatprep.subr.mxu0 0.0
      %385 = vmatpush1.msra.mxu0 0.0
      %386 = vmatprep.subr.mxu0 0.0
      %387 = vmatpush1.msra.mxu0 0.0
      %388 = vmatprep.subr.mxu0 0.0
      %389 = vmatpush1.msra.mxu0 0.0
      %390 = vmatprep.subr.mxu0 0.0
      %391 = vmatpush1.msra.mxu0 0.0
      %392 = vmatprep.mubr.f32.mxu0 0.0
      %393 = vmatmul.mubr.f32.gmra.mrb[0].mxu0 %v323
      %v394 = vpop.f32.mrb[0].mxu0
      %v395 = vadd.f32 %v320, %v394
      %v396 = vpop.f32.mrb[0].mxu0
      %397 = vdwg.mxu0
      %s398 = scalar_lea.vmem %s1, 80
      %v399 = vld [vmem:[%s398] sm:$0xff]
      %v400 = vld [vmem:[%s398 + $0x8] sm:$0xff]
      %v401 = vld [vmem:[%s398 + $0x10] sm:$0xff]
      %v402 = vld [vmem:[%s398 + $0x18] sm:$0xff]
      %v403 = vld [vmem:[%s398 + $0x20] sm:$0xf]
      %v405 = vsel %vm246, %v225, 0
      %v408 = vsel %vm249, %v403, 0
      %410 = vmatprep.subr.mxu0 0.0
      %411 = vmatpush1.msra.mxu0 %v399
      %412 = vmatprep.subr.mxu0 0.0
      %413 = vmatpush1.msra.mxu0 %v400
      %414 = vmatprep.subr.mxu0 0.0
      %415 = vmatpush1.msra.mxu0 %v401
      %416 = vmatprep.subr.mxu0 0.0
      %417 = vmatpush1.msra.mxu0 %v402
      %418 = vmatprep.subr.mxu0 0.0
      %419 = vmatpush1.msra.mxu0 %v408
      %420 = vmatprep.subr.mxu0 0.0
      %421 = vmatpush1.msra.mxu0 0.0
      %422 = vmatprep.subr.mxu0 0.0
      %423 = vmatpush1.msra.mxu0 0.0
      %424 = vmatprep.subr.mxu0 0.0
      %425 = vmatpush1.msra.mxu0 0.0
      %426 = vmatprep.subr.mxu0 0.0
      %427 = vmatpush1.msra.mxu0 0.0
      %428 = vmatprep.subr.mxu0 0.0
      %429 = vmatpush1.msra.mxu0 0.0
      %430 = vmatprep.subr.mxu0 0.0
      %431 = vmatpush1.msra.mxu0 0.0
      %432 = vmatprep.subr.mxu0 0.0
      %433 = vmatpush1.msra.mxu0 0.0
      %434 = vmatprep.subr.mxu0 0.0
      %435 = vmatpush1.msra.mxu0 0.0
      %436 = vmatprep.subr.mxu0 0.0
      %437 = vmatpush1.msra.mxu0 0.0
      %438 = vmatprep.subr.mxu0 0.0
      %439 = vmatpush1.msra.mxu0 0.0
      %440 = vmatprep.subr.mxu0 0.0
      %441 = vmatpush1.msra.mxu0 0.0
      %442 = vmatprep.subr.mxu0 0.0
      %443 = vmatpush1.msra.mxu0 0.0
      %444 = vmatprep.subr.mxu0 0.0
      %445 = vmatpush1.msra.mxu0 0.0
      %446 = vmatprep.subr.mxu0 0.0
      %447 = vmatpush1.msra.mxu0 0.0
      %448 = vmatprep.subr.mxu0 0.0
      %449 = vmatpush1.msra.mxu0 0.0
      %450 = vmatprep.subr.mxu0 0.0
      %451 = vmatpush1.msra.mxu0 0.0
      %452 = vmatprep.subr.mxu0 0.0
      %453 = vmatpush1.msra.mxu0 0.0
      %454 = vmatprep.subr.mxu0 0.0
      %455 = vmatpush1.msra.mxu0 0.0
      %456 = vmatprep.subr.mxu0 0.0
      %457 = vmatpush1.msra.mxu0 0.0
      %458 = vmatprep.subr.mxu0 0.0
      %459 = vmatpush1.msra.mxu0 0.0
      %460 = vmatprep.subr.mxu0 0.0
      %461 = vmatpush1.msra.mxu0 0.0
      %462 = vmatprep.subr.mxu0 0.0
      %463 = vmatpush1.msra.mxu0 0.0
      %464 = vmatprep.subr.mxu0 0.0
      %465 = vmatpush1.msra.mxu0 0.0
      %466 = vmatprep.subr.mxu0 0.0
      %467 = vmatpush1.msra.mxu0 0.0
      %468 = vmatprep.subr.mxu0 0.0
      %469 = vmatpush1.msra.mxu0 0.0
      %470 = vmatprep.subr.mxu0 0.0
      %471 = vmatpush1.msra.mxu0 0.0
      %472 = vmatprep.subr.mxu0 0.0
      %473 = vmatpush1.msra.mxu0 0.0
      %474 = vmatprep.mubr.f32.mxu0 0.0
      %475 = vmatmul.mubr.f32.gmra.mrb[0].mxu0 %v405
      %v476 = vpop.f32.mrb[0].mxu0
      %v477 = vadd.f32 0.0, %v476
      %v478 = vpop.f32.mrb[0].mxu0
      %479 = vdwg.mxu0
      %v480 = vadd.f32 %v395, %v477
      %s481 = scalar_lea.vmem %s1, 120
      %v482 = vld [vmem:[%s481] sm:$0xff]
      %v483 = vld [vmem:[%s481 + $0x8] sm:$0xff]
      %v484 = vld [vmem:[%s481 + $0x10] sm:$0xff]
      %v485 = vld [vmem:[%s481 + $0x18] sm:$0xff]
      %v486 = vld [vmem:[%s481 + $0x20] sm:$0xf]
      %v488 = vrot.slane %v225, 1
      %v489 = vrot.slane %v226, 1
      %v490 = vsel %vm242, %v488, %v489
      %v491 = vsel %vm246, %v490, 0
      %v494 = vsel %vm249, %v486, 0
      %496 = vmatprep.subr.mxu0 0.0
      %497 = vmatpush1.msra.mxu0 %v482
      %498 = vmatprep.subr.mxu0 0.0
      %499 = vmatpush1.msra.mxu0 %v483
      %500 = vmatprep.subr.mxu0 0.0
      %501 = vmatpush1.msra.mxu0 %v484
      %502 = vmatprep.subr.mxu0 0.0
      %503 = vmatpush1.msra.mxu0 %v485
      %504 = vmatprep.subr.mxu0 0.0
      %505 = vmatpush1.msra.mxu0 %v494
      %506 = vmatprep.subr.mxu0 0.0
      %507 = vmatpush1.msra.mxu0 0.0
      %508 = vmatprep.subr.mxu0 0.0
      %509 = vmatpush1.msra.mxu0 0.0
      %510 = vmatprep.subr.mxu0 0.0
      %511 = vmatpush1.msra.mxu0 0.0
      %512 = vmatprep.subr.mxu0 0.0
      %513 = vmatpush1.msra.mxu0 0.0
      %514 = vmatprep.subr.mxu0 0.0
      %515 = vmatpush1.msra.mxu0 0.0
      %516 = vmatprep.subr.mxu0 0.0
      %517 = vmatpush1.msra.mxu0 0.0
      %518 = vmatprep.subr.mxu0 0.0
      %519 = vmatpush1.msra.mxu0 0.0
      %520 = vmatprep.subr.mxu0 0.0
      %521 = vmatpush1.msra.mxu0 0.0
      %522 = vmatprep.subr.mxu0 0.0
      %523 = vmatpush1.msra.mxu0 0.0
      %524 = vmatprep.subr.mxu0 0.0
      %525 = vmatpush1.msra.mxu0 0.0
      %526 = vmatprep.subr.mxu0 0.0
      %527 = vmatpush1.msra.mxu0 0.0
      %528 = vmatprep.subr.mxu0 0.0
      %529 = vmatpush1.msra.mxu0 0.0
      %530 = vmatprep.subr.mxu0 0.0
      %531 = vmatpush1.msra.mxu0 0.0
      %532 = vmatprep.subr.mxu0 0.0
      %533 = vmatpush1.msra.mxu0 0.0
      %534 = vmatprep.subr.mxu0 0.0
      %535 = vmatpush1.msra.mxu0 0.0
      %536 = vmatprep.subr.mxu0 0.0
      %537 = vmatpush1.msra.mxu0 0.0
      %538 = vmatprep.subr.mxu0 0.0
      %539 = vmatpush1.msra.mxu0 0.0
      %540 = vmatprep.subr.mxu0 0.0
      %541 = vmatpush1.msra.mxu0 0.0
      %542 = vmatprep.subr.mxu0 0.0
      %543 = vmatpush1.msra.mxu0 0.0
      %544 = vmatprep.subr.mxu0 0.0
      %545 = vmatpush1.msra.mxu0 0.0
      %546 = vmatprep.subr.mxu0 0.0
      %547 = vmatpush1.msra.mxu0 0.0
      %548 = vmatprep.subr.mxu0 0.0
      %549 = vmatpush1.msra.mxu0 0.0
      %550 = vmatprep.subr.mxu0 0.0
      %551 = vmatpush1.msra.mxu0 0.0
      %552 = vmatprep.subr.mxu0 0.0
      %553 = vmatpush1.msra.mxu0 0.0
      %554 = vmatprep.subr.mxu0 0.0
      %555 = vmatpush1.msra.mxu0 0.0
      %556 = vmatprep.subr.mxu0 0.0
      %557 = vmatpush1.msra.mxu0 0.0
      %558 = vmatprep.subr.mxu0 0.0
      %559 = vmatpush1.msra.mxu0 0.0
      %560 = vmatprep.mubr.f32.mxu0 0.0
      %561 = vmatmul.mubr.f32.gmra.mrb[0].mxu0 %v491
      %v562 = vpop.f32.mrb[0].mxu0
      %v563 = vadd.f32 0.0, %v562
      %v564 = vpop.f32.mrb[0].mxu0
      %565 = vdwg.mxu0
      %v566 = vadd.f32 %v480, %v563
      %s567 = scalar_lea.vmem %s1, 160
      %v568 = vld [vmem:[%s567] sm:$0xff]
      %v569 = vld [vmem:[%s567 + $0x8] sm:$0xff]
      %v570 = vld [vmem:[%s567 + $0x10] sm:$0xff]
      %v571 = vld [vmem:[%s567 + $0x18] sm:$0xff]
      %v572 = vld [vmem:[%s567 + $0x20] sm:$0xf]
      %v574 = vsel %vm246, %v227, 0
      %v577 = vsel %vm249, %v572, 0
      %579 = vmatprep.subr.mxu0 0.0
      %580 = vmatpush1.msra.mxu0 %v568
      %581 = vmatprep.subr.mxu0 0.0
      %582 = vmatpush1.msra.mxu0 %v569
      %583 = vmatprep.subr.mxu0 0.0
      %584 = vmatpush1.msra.mxu0 %v570
      %585 = vmatprep.subr.mxu0 0.0
      %586 = vmatpush1.msra.mxu0 %v571
      %587 = vmatprep.subr.mxu0 0.0
      %588 = vmatpush1.msra.mxu0 %v577
      %589 = vmatprep.subr.mxu0 0.0
      %590 = vmatpush1.msra.mxu0 0.0
      %591 = vmatprep.subr.mxu0 0.0
      %592 = vmatpush1.msra.mxu0 0.0
      %593 = vmatprep.subr.mxu0 0.0
      %594 = vmatpush1.msra.mxu0 0.0
      %595 = vmatprep.subr.mxu0 0.0
      %596 = vmatpush1.msra.mxu0 0.0
      %597 = vmatprep.subr.mxu0 0.0
      %598 = vmatpush1.msra.mxu0 0.0
      %599 = vmatprep.subr.mxu0 0.0
      %600 = vmatpush1.msra.mxu0 0.0
      %601 = vmatprep.subr.mxu0 0.0
      %602 = vmatpush1.msra.mxu0 0.0
      %603 = vmatprep.subr.mxu0 0.0
      %604 = vmatpush1.msra.mxu0 0.0
      %605 = vmatprep.subr.mxu0 0.0
      %606 = vmatpush1.msra.mxu0 0.0
      %607 = vmatprep.subr.mxu0 0.0
      %608 = vmatpush1.msra.mxu0 0.0
      %609 = vmatprep.subr.mxu0 0.0
      %610 = vmatpush1.msra.mxu0 0.0
      %611 = vmatprep.subr.mxu0 0.0
      %612 = vmatpush1.msra.mxu0 0.0
      %613 = vmatprep.subr.mxu0 0.0
      %614 = vmatpush1.msra.mxu0 0.0
      %615 = vmatprep.subr.mxu0 0.0
      %616 = vmatpush1.msra.mxu0 0.0
      %617 = vmatprep.subr.mxu0 0.0
      %618 = vmatpush1.msra.mxu0 0.0
      %619 = vmatprep.subr.mxu0 0.0
      %620 = vmatpush1.msra.mxu0 0.0
      %621 = vmatprep.subr.mxu0 0.0
      %622 = vmatpush1.msra.mxu0 0.0
      %623 = vmatprep.subr.mxu0 0.0
      %624 = vmatpush1.msra.mxu0 0.0
      %625 = vmatprep.subr.mxu0 0.0
      %626 = vmatpush1.msra.mxu0 0.0
      %627 = vmatprep.subr.mxu0 0.0
      %628 = vmatpush1.msra.mxu0 0.0
      %629 = vmatprep.subr.mxu0 0.0
      %630 = vmatpush1.msra.mxu0 0.0
      %631 = vmatprep.subr.mxu0 0.0
      %632 = vmatpush1.msra.mxu0 0.0
      %633 = vmatprep.subr.mxu0 0.0
      %634 = vmatpush1.msra.mxu0 0.0
      %635 = vmatprep.subr.mxu0 0.0
      %636 = vmatpush1.msra.mxu0 0.0
      %637 = vmatprep.subr.mxu0 0.0
      %638 = vmatpush1.msra.mxu0 0.0
      %639 = vmatprep.subr.mxu0 0.0
      %640 = vmatpush1.msra.mxu0 0.0
      %641 = vmatprep.subr.mxu0 0.0
      %642 = vmatpush1.msra.mxu0 0.0
      %643 = vmatprep.mubr.f32.mxu0 0.0
      %644 = vmatmul.mubr.f32.gmra.mrb[0].mxu0 %v574
      %v645 = vpop.f32.mrb[0].mxu0
      %v646 = vadd.f32 0.0, %v645
      %v647 = vpop.f32.mrb[0].mxu0
      %648 = vdwg.mxu0
      %v649 = vadd.f32 %v566, %v646
      %s650 = scalar_lea.vmem %s1, 200
      %v651 = vld [vmem:[%s650] sm:$0xff]
      %v652 = vld [vmem:[%s650 + $0x8] sm:$0xff]
      %v653 = vld [vmem:[%s650 + $0x10] sm:$0xff]
      %v654 = vld [vmem:[%s650 + $0x18] sm:$0xff]
      %v655 = vld [vmem:[%s650 + $0x20] sm:$0xf]
      %v657 = vsel %vm246, %v228, 0
      %v660 = vsel %vm249, %v655, 0
      %662 = vmatprep.subr.mxu0 0.0
      %663 = vmatpush1.msra.mxu0 %v651
      %664 = vmatprep.subr.mxu0 0.0
      %665 = vmatpush1.msra.mxu0 %v652
      %666 = vmatprep.subr.mxu0 0.0
      %667 = vmatpush1.msra.mxu0 %v653
      %668 = vmatprep.subr.mxu0 0.0
      %669 = vmatpush1.msra.mxu0 %v654
      %670 = vmatprep.subr.mxu0 0.0
      %671 = vmatpush1.msra.mxu0 %v660
      %672 = vmatprep.subr.mxu0 0.0
      %673 = vmatpush1.msra.mxu0 0.0
      %674 = vmatprep.subr.mxu0 0.0
      %675 = vmatpush1.msra.mxu0 0.0
      %676 = vmatprep.subr.mxu0 0.0
      %677 = vmatpush1.msra.mxu0 0.0
      %678 = vmatprep.subr.mxu0 0.0
      %679 = vmatpush1.msra.mxu0 0.0
      %680 = vmatprep.subr.mxu0 0.0
      %681 = vmatpush1.msra.mxu0 0.0
      %682 = vmatprep.subr.mxu0 0.0
      %683 = vmatpush1.msra.mxu0 0.0
      %684 = vmatprep.subr.mxu0 0.0
      %685 = vmatpush1.msra.mxu0 0.0
      %686 = vmatprep.subr.mxu0 0.0
      %687 = vmatpush1.msra.mxu0 0.0
      %688 = vmatprep.subr.mxu0 0.0
      %689 = vmatpush1.msra.mxu0 0.0
      %690 = vmatprep.subr.mxu0 0.0
      %691 = vmatpush1.msra.mxu0 0.0
      %692 = vmatprep.subr.mxu0 0.0
      %693 = vmatpush1.msra.mxu0 0.0
      %694 = vmatprep.subr.mxu0 0.0
      %695 = vmatpush1.msra.mxu0 0.0
      %696 = vmatprep.subr.mxu0 0.0
      %697 = vmatpush1.msra.mxu0 0.0
      %698 = vmatprep.subr.mxu0 0.0
      %699 = vmatpush1.msra.mxu0 0.0
      %700 = vmatprep.subr.mxu0 0.0
      %701 = vmatpush1.msra.mxu0 0.0
      %702 = vmatprep.subr.mxu0 0.0
      %703 = vmatpush1.msra.mxu0 0.0
      %704 = vmatprep.subr.mxu0 0.0
      %705 = vmatpush1.msra.mxu0 0.0
      %706 = vmatprep.subr.mxu0 0.0
      %707 = vmatpush1.msra.mxu0 0.0
      %708 = vmatprep.subr.mxu0 0.0
      %709 = vmatpush1.msra.mxu0 0.0
      %710 = vmatprep.subr.mxu0 0.0
      %711 = vmatpush1.msra.mxu0 0.0
      %712 = vmatprep.subr.mxu0 0.0
      %713 = vmatpush1.msra.mxu0 0.0
      %714 = vmatprep.subr.mxu0 0.0
      %715 = vmatpush1.msra.mxu0 0.0
      %716 = vmatprep.subr.mxu0 0.0
      %717 = vmatpush1.msra.mxu0 0.0
      %718 = vmatprep.subr.mxu0 0.0
      %719 = vmatpush1.msra.mxu0 0.0
      %720 = vmatprep.subr.mxu0 0.0
      %721 = vmatpush1.msra.mxu0 0.0
      %722 = vmatprep.subr.mxu0 0.0
      %723 = vmatpush1.msra.mxu0 0.0
      %724 = vmatprep.subr.mxu0 0.0
      %725 = vmatpush1.msra.mxu0 0.0
      %726 = vmatprep.mubr.f32.mxu0 0.0
      %727 = vmatmul.mubr.f32.gmra.mrb[0].mxu0 %v657
      %v728 = vpop.f32.mrb[0].mxu0
      %v729 = vadd.f32 0.0, %v728
      %v730 = vpop.f32.mrb[0].mxu0
      %731 = vdwg.mxu0
      %v732 = vadd.f32 %v649, %v729
      %v733 = vld [vmem:[%s4] sm:$0x1]
      %v734 = vlaneseq
      %v735 = vshrl.u32 %v734, 7
      %v736 = vsub.s32 0, %v735
      %v737 = vrot.slane %v733, %v736
      %v738 = vadd.f32 %v732, %v737
      %vm739 = vcmask 253952
      %740 = vst.msk [vmem:[#allocation2] sm:$0x1] %vm739, 0.0
      %741 = vst.msk [vmem:[#allocation2 + $0x9] sm:$0x1] %vm739, 0.0
      %v742 = vmax.f32 %v738, 0.0
      %vm743 = vcmask 261120
      %744 = vst.msk [vmem:[#allocation2 + $0x1] sm:$0xff] %vm743, %v742
      %v745 = vld [vmem:[#allocation2] sm:$0xff]
      %v746 = vld [vmem:[%s2] sm:$0xff]
      %v747 = vld [vmem:[%s2 + $0x8] sm:$0xff]
      %v748 = vld [vmem:[%s2 + $0x10] sm:$0xff]
      %v749 = vld [vmem:[%s2 + $0x18] sm:$0xff]
      %v750 = vld [vmem:[#allocation2 + $0x1] sm:$0xff]
      %s751 = scalar_lea.vmem %s2, 32
      %v752 = vld [vmem:[%s751] sm:$0xff]
      %v753 = vld [vmem:[%s751 + $0x8] sm:$0xff]
      %v754 = vld [vmem:[%s751 + $0x10] sm:$0xff]
      %v755 = vld [vmem:[%s751 + $0x18] sm:$0xff]
      %v757 = vsel %vm743, %v750, 0
      %759 = vmatprep.subr.mxu0 0.0
      %760 = vmatpush1.msra.mxu0 %v752
      %761 = vmatprep.subr.mxu0 0.0
      %762 = vmatpush1.msra.mxu0 %v753
      %763 = vmatprep.subr.mxu0 0.0
      %764 = vmatpush1.msra.mxu0 %v754
      %765 = vmatprep.subr.mxu0 0.0
      %766 = vmatpush1.msra.mxu0 %v755
      %767 = vmatprep.subr.mxu0 0.0
      %768 = vmatpush1.msra.mxu0 0.0
      %769 = vmatprep.subr.mxu0 0.0
      %770 = vmatpush1.msra.mxu0 0.0
      %771 = vmatprep.subr.mxu0 0.0
      %772 = vmatpush1.msra.mxu0 0.0
      %773 = vmatprep.subr.mxu0 0.0
      %774 = vmatpush1.msra.mxu0 0.0
      %775 = vmatprep.subr.mxu0 0.0
      %776 = vmatpush1.msra.mxu0 0.0
      %777 = vmatprep.subr.mxu0 0.0
      %778 = vmatpush1.msra.mxu0 0.0
      %779 = vmatprep.subr.mxu0 0.0
      %780 = vmatpush1.msra.mxu0 0.0
      %781 = vmatprep.subr.mxu0 0.0
      %782 = vmatpush1.msra.mxu0 0.0
      %783 = vmatprep.subr.mxu0 0.0
      %784 = vmatpush1.msra.mxu0 0.0
      %785 = vmatprep.subr.mxu0 0.0
      %786 = vmatpush1.msra.mxu0 0.0
      %787 = vmatprep.subr.mxu0 0.0
      %788 = vmatpush1.msra.mxu0 0.0
      %789 = vmatprep.subr.mxu0 0.0
      %790 = vmatpush1.msra.mxu0 0.0
      %791 = vmatprep.subr.mxu0 0.0
      %792 = vmatpush1.msra.mxu0 0.0
      %793 = vmatprep.subr.mxu0 0.0
      %794 = vmatpush1.msra.mxu0 0.0
      %795 = vmatprep.subr.mxu0 0.0
      %796 = vmatpush1.msra.mxu0 0.0
      %797 = vmatprep.subr.mxu0 0.0
      %798 = vmatpush1.msra.mxu0 0.0
      %799 = vmatprep.subr.mxu0 0.0
      %800 = vmatpush1.msra.mxu0 0.0
      %801 = vmatprep.subr.mxu0 0.0
      %802 = vmatpush1.msra.mxu0 0.0
      %803 = vmatprep.subr.mxu0 0.0
      %804 = vmatpush1.msra.mxu0 0.0
      %805 = vmatprep.subr.mxu0 0.0
      %806 = vmatpush1.msra.mxu0 0.0
      %807 = vmatprep.subr.mxu0 0.0
      %808 = vmatpush1.msra.mxu0 0.0
      %809 = vmatprep.subr.mxu0 0.0
      %810 = vmatpush1.msra.mxu0 0.0
      %811 = vmatprep.subr.mxu0 0.0
      %812 = vmatpush1.msra.mxu0 0.0
      %813 = vmatprep.subr.mxu0 0.0
      %814 = vmatpush1.msra.mxu0 0.0
      %815 = vmatprep.subr.mxu0 0.0
      %816 = vmatpush1.msra.mxu0 0.0
      %817 = vmatprep.subr.mxu0 0.0
      %818 = vmatpush1.msra.mxu0 0.0
      %819 = vmatprep.subr.mxu0 0.0
      %820 = vmatpush1.msra.mxu0 0.0
      %821 = vmatprep.subr.mxu0 0.0
      %822 = vmatpush1.msra.mxu0 0.0
      %823 = vmatprep.mubr.f32.mxu0 0.0
      %824 = vmatmul.mubr.f32.gmra.mrb[0].mxu0 %v757
      %v825 = vpop.f32.mrb[0].mxu0
      %v826 = vadd.f32 0.0, %v825
      %v827 = vpop.f32.mrb[0].mxu0
      %828 = vdwg.mxu0
      %v830 = vsel %vm743, %v745, 0
      %832 = vmatprep.subr.mxu0 0.0
      %833 = vmatpush1.msra.mxu0 %v746
      %834 = vmatprep.subr.mxu0 0.0
      %835 = vmatpush1.msra.mxu0 %v747
      %836 = vmatprep.subr.mxu0 0.0
      %837 = vmatpush1.msra.mxu0 %v748
      %838 = vmatprep.subr.mxu0 0.0
      %839 = vmatpush1.msra.mxu0 %v749
      %840 = vmatprep.subr.mxu0 0.0
      %841 = vmatpush1.msra.mxu0 0.0
      %842 = vmatprep.subr.mxu0 0.0
      %843 = vmatpush1.msra.mxu0 0.0
      %844 = vmatprep.subr.mxu0 0.0
      %845 = vmatpush1.msra.mxu0 0.0
      %846 = vmatprep.subr.mxu0 0.0
      %847 = vmatpush1.msra.mxu0 0.0
      %848 = vmatprep.subr.mxu0 0.0
      %849 = vmatpush1.msra.mxu0 0.0
      %850 = vmatprep.subr.mxu0 0.0
      %851 = vmatpush1.msra.mxu0 0.0
      %852 = vmatprep.subr.mxu0 0.0
      %853 = vmatpush1.msra.mxu0 0.0
      %854 = vmatprep.subr.mxu0 0.0
      %855 = vmatpush1.msra.mxu0 0.0
      %856 = vmatprep.subr.mxu0 0.0
      %857 = vmatpush1.msra.mxu0 0.0
      %858 = vmatprep.subr.mxu0 0.0
      %859 = vmatpush1.msra.mxu0 0.0
      %860 = vmatprep.subr.mxu0 0.0
      %861 = vmatpush1.msra.mxu0 0.0
      %862 = vmatprep.subr.mxu0 0.0
      %863 = vmatpush1.msra.mxu0 0.0
      %864 = vmatprep.subr.mxu0 0.0
      %865 = vmatpush1.msra.mxu0 0.0
      %866 = vmatprep.subr.mxu0 0.0
      %867 = vmatpush1.msra.mxu0 0.0
      %868 = vmatprep.subr.mxu0 0.0
      %869 = vmatpush1.msra.mxu0 0.0
      %870 = vmatprep.subr.mxu0 0.0
      %871 = vmatpush1.msra.mxu0 0.0
      %872 = vmatprep.subr.mxu0 0.0
      %873 = vmatpush1.msra.mxu0 0.0
      %874 = vmatprep.subr.mxu0 0.0
      %875 = vmatpush1.msra.mxu0 0.0
      %876 = vmatprep.subr.mxu0 0.0
      %877 = vmatpush1.msra.mxu0 0.0
      %878 = vmatprep.subr.mxu0 0.0
      %879 = vmatpush1.msra.mxu0 0.0
      %880 = vmatprep.subr.mxu0 0.0
      %881 = vmatpush1.msra.mxu0 0.0
      %882 = vmatprep.subr.mxu0 0.0
      %883 = vmatpush1.msra.mxu0 0.0
      %884 = vmatprep.subr.mxu0 0.0
      %885 = vmatpush1.msra.mxu0 0.0
      %886 = vmatprep.subr.mxu0 0.0
      %887 = vmatpush1.msra.mxu0 0.0
      %888 = vmatprep.subr.mxu0 0.0
      %889 = vmatpush1.msra.mxu0 0.0
      %890 = vmatprep.subr.mxu0 0.0
      %891 = vmatpush1.msra.mxu0 0.0
      %892 = vmatprep.subr.mxu0 0.0
      %893 = vmatpush1.msra.mxu0 0.0
      %894 = vmatprep.subr.mxu0 0.0
      %895 = vmatpush1.msra.mxu0 0.0
      %896 = vmatprep.mubr.f32.mxu0 0.0
      %897 = vmatmul.mubr.f32.gmra.mrb[0].mxu0 %v830
      %v898 = vpop.f32.mrb[0].mxu0
      %v899 = vadd.f32 %v826, %v898
      %v900 = vpop.f32.mrb[0].mxu0
      %901 = vdwg.mxu0
      %v902 = vld [vmem:[#allocation2 + $0x2] sm:$0xff]
      %s903 = scalar_lea.vmem %s2, 64
      %v904 = vld [vmem:[%s903] sm:$0xff]
      %v905 = vld [vmem:[%s903 + $0x8] sm:$0xff]
      %v906 = vld [vmem:[%s903 + $0x10] sm:$0xff]
      %v907 = vld [vmem:[%s903 + $0x18] sm:$0xff]
      %v909 = vsel %vm743, %v902, 0
      %911 = vmatprep.subr.mxu0 0.0
      %912 = vmatpush1.msra.mxu0 %v904
      %913 = vmatprep.subr.mxu0 0.0
      %914 = vmatpush1.msra.mxu0 %v905
      %915 = vmatprep.subr.mxu0 0.0
      %916 = vmatpush1.msra.mxu0 %v906
      %917 = vmatprep.subr.mxu0 0.0
      %918 = vmatpush1.msra.mxu0 %v907
      %919 = vmatprep.subr.mxu0 0.0
      %920 = vmatpush1.msra.mxu0 0.0
      %921 = vmatprep.subr.mxu0 0.0
      %922 = vmatpush1.msra.mxu0 0.0
      %923 = vmatprep.subr.mxu0 0.0
      %924 = vmatpush1.msra.mxu0 0.0
      %925 = vmatprep.subr.mxu0 0.0
      %926 = vmatpush1.msra.mxu0 0.0
      %927 = vmatprep.subr.mxu0 0.0
      %928 = vmatpush1.msra.mxu0 0.0
      %929 = vmatprep.subr.mxu0 0.0
      %930 = vmatpush1.msra.mxu0 0.0
      %931 = vmatprep.subr.mxu0 0.0
      %932 = vmatpush1.msra.mxu0 0.0
      %933 = vmatprep.subr.mxu0 0.0
      %934 = vmatpush1.msra.mxu0 0.0
      %935 = vmatprep.subr.mxu0 0.0
      %936 = vmatpush1.msra.mxu0 0.0
      %937 = vmatprep.subr.mxu0 0.0
      %938 = vmatpush1.msra.mxu0 0.0
      %939 = vmatprep.subr.mxu0 0.0
      %940 = vmatpush1.msra.mxu0 0.0
      %941 = vmatprep.subr.mxu0 0.0
      %942 = vmatpush1.msra.mxu0 0.0
      %943 = vmatprep.subr.mxu0 0.0
      %944 = vmatpush1.msra.mxu0 0.0
      %945 = vmatprep.subr.mxu0 0.0
      %946 = vmatpush1.msra.mxu0 0.0
      %947 = vmatprep.subr.mxu0 0.0
      %948 = vmatpush1.msra.mxu0 0.0
      %949 = vmatprep.subr.mxu0 0.0
      %950 = vmatpush1.msra.mxu0 0.0
      %951 = vmatprep.subr.mxu0 0.0
      %952 = vmatpush1.msra.mxu0 0.0
      %953 = vmatprep.subr.mxu0 0.0
      %954 = vmatpush1.msra.mxu0 0.0
      %955 = vmatprep.subr.mxu0 0.0
      %956 = vmatpush1.msra.mxu0 0.0
      %957 = vmatprep.subr.mxu0 0.0
      %958 = vmatpush1.msra.mxu0 0.0
      %959 = vmatprep.subr.mxu0 0.0
      %960 = vmatpush1.msra.mxu0 0.0
      %961 = vmatprep.subr.mxu0 0.0
      %962 = vmatpush1.msra.mxu0 0.0
      %963 = vmatprep.subr.mxu0 0.0
      %964 = vmatpush1.msra.mxu0 0.0
      %965 = vmatprep.subr.mxu0 0.0
      %966 = vmatpush1.msra.mxu0 0.0
      %967 = vmatprep.subr.mxu0 0.0
      %968 = vmatpush1.msra.mxu0 0.0
      %969 = vmatprep.subr.mxu0 0.0
      %970 = vmatpush1.msra.mxu0 0.0
      %971 = vmatprep.subr.mxu0 0.0
      %972 = vmatpush1.msra.mxu0 0.0
      %973 = vmatprep.subr.mxu0 0.0
      %974 = vmatpush1.msra.mxu0 0.0
      %975 = vmatprep.mubr.f32.mxu0 0.0
      %976 = vmatmul.mubr.f32.gmra.mrb[0].mxu0 %v909
      %v977 = vpop.f32.mrb[0].mxu0
      %v978 = vadd.f32 0.0, %v977
      %v979 = vpop.f32.mrb[0].mxu0
      %980 = vdwg.mxu0
      %v981 = vadd.f32 %v899, %v978
      %v982 = vld [vmem:[%s4 + $0x1] sm:$0x1]
      %v983 = vlaneseq
      %v984 = vshrl.u32 %v983, 7
      %v985 = vsub.s32 0, %v984
      %v986 = vrot.slane %v982, %v985
      %v987 = vadd.f32 %v981, %v986
      %v988 = vmax.f32 %v987, 0.0
      %989 = vst.msk [vmem:[#allocation2 + $0x1] sm:$0xff] %vm743, %v988
      %v990 = vld [vmem:[#allocation2] sm:$0xff]
      %v991 = vld [vmem:[%s3] sm:$0xff]
      %v992 = vld [vmem:[%s3 + $0x8] sm:$0xff]
      %v993 = vld [vmem:[%s3 + $0x10] sm:$0xff]
      %v994 = vld [vmem:[%s3 + $0x18] sm:$0xff]
      %v995 = vld [vmem:[#allocation2 + $0x1] sm:$0xff]
      %s996 = scalar_lea.vmem %s3, 32
      %v997 = vld [vmem:[%s996] sm:$0xff]
      %v998 = vld [vmem:[%s996 + $0x8] sm:$0xff]
      %v999 = vld [vmem:[%s996 + $0x10] sm:$0xff]
      %v1000 = vld [vmem:[%s996 + $0x18] sm:$0xff]
      %v1002 = vsel %vm743, %v995, 0
      %1004 = vmatprep.subr.mxu0 0.0
      %1005 = vmatpush1.msra.mxu0 %v997
      %1006 = vmatprep.subr.mxu0 0.0
      %1007 = vmatpush1.msra.mxu0 %v998
      %1008 = vmatprep.subr.mxu0 0.0
      %1009 = vmatpush1.msra.mxu0 %v999
      %1010 = vmatprep.subr.mxu0 0.0
      %1011 = vmatpush1.msra.mxu0 %v1000
      %1012 = vmatprep.subr.mxu0 0.0
      %1013 = vmatpush1.msra.mxu0 0.0
      %1014 = vmatprep.subr.mxu0 0.0
      %1015 = vmatpush1.msra.mxu0 0.0
      %1016 = vmatprep.subr.mxu0 0.0
      %1017 = vmatpush1.msra.mxu0 0.0
      %1018 = vmatprep.subr.mxu0 0.0
      %1019 = vmatpush1.msra.mxu0 0.0
      %1020 = vmatprep.subr.mxu0 0.0
      %1021 = vmatpush1.msra.mxu0 0.0
      %1022 = vmatprep.subr.mxu0 0.0
      %1023 = vmatpush1.msra.mxu0 0.0
      %1024 = vmatprep.subr.mxu0 0.0
      %1025 = vmatpush1.msra.mxu0 0.0
      %1026 = vmatprep.subr.mxu0 0.0
      %1027 = vmatpush1.msra.mxu0 0.0
      %1028 = vmatprep.subr.mxu0 0.0
      %1029 = vmatpush1.msra.mxu0 0.0
      %1030 = vmatprep.subr.mxu0 0.0
      %1031 = vmatpush1.msra.mxu0 0.0
      %1032 = vmatprep.subr.mxu0 0.0
      %1033 = vmatpush1.msra.mxu0 0.0
      %1034 = vmatprep.subr.mxu0 0.0
      %1035 = vmatpush1.msra.mxu0 0.0
      %1036 = vmatprep.subr.mxu0 0.0
      %1037 = vmatpush1.msra.mxu0 0.0
      %1038 = vmatprep.subr.mxu0 0.0
      %1039 = vmatpush1.msra.mxu0 0.0
      %1040 = vmatprep.subr.mxu0 0.0
      %1041 = vmatpush1.msra.mxu0 0.0
      %1042 = vmatprep.subr.mxu0 0.0
      %1043 = vmatpush1.msra.mxu0 0.0
      %1044 = vmatprep.subr.mxu0 0.0
      %1045 = vmatpush1.msra.mxu0 0.0
      %1046 = vmatprep.subr.mxu0 0.0
      %1047 = vmatpush1.msra.mxu0 0.0
      %1048 = vmatprep.subr.mxu0 0.0
      %1049 = vmatpush1.msra.mxu0 0.0
      %1050 = vmatprep.subr.mxu0 0.0
      %1051 = vmatpush1.msra.mxu0 0.0
      %1052 = vmatprep.subr.mxu0 0.0
      %1053 = vmatpush1.msra.mxu0 0.0
      %1054 = vmatprep.subr.mxu0 0.0
      %1055 = vmatpush1.msra.mxu0 0.0
      %1056 = vmatprep.subr.mxu0 0.0
      %1057 = vmatpush1.msra.mxu0 0.0
      %1058 = vmatprep.subr.mxu0 0.0
      %1059 = vmatpush1.msra.mxu0 0.0
      %1060 = vmatprep.subr.mxu0 0.0
      %1061 = vmatpush1.msra.mxu0 0.0
      %1062 = vmatprep.subr.mxu0 0.0
      %1063 = vmatpush1.msra.mxu0 0.0
      %1064 = vmatprep.subr.mxu0 0.0
      %1065 = vmatpush1.msra.mxu0 0.0
      %1066 = vmatprep.subr.mxu0 0.0
      %1067 = vmatpush1.msra.mxu0 0.0
      %1068 = vmatprep.mubr.f32.mxu0 0.0
      %1069 = vmatmul.mubr.f32.gmra.mrb[0].mxu0 %v1002
      %v1070 = vpop.f32.mrb[0].mxu0
      %v1071 = vadd.f32 0.0, %v1070
      %v1072 = vpop.f32.mrb[0].mxu0
      %1073 = vdwg.mxu0
      %v1075 = vsel %vm743, %v990, 0
      %1077 = vmatprep.subr.mxu0 0.0
      %1078 = vmatpush1.msra.mxu0 %v991
      %1079 = vmatprep.subr.mxu0 0.0
      %1080 = vmatpush1.msra.mxu0 %v992
      %1081 = vmatprep.subr.mxu0 0.0
      %1082 = vmatpush1.msra.mxu0 %v993
      %1083 = vmatprep.subr.mxu0 0.0
      %1084 = vmatpush1.msra.mxu0 %v994
      %1085 = vmatprep.subr.mxu0 0.0
      %1086 = vmatpush1.msra.mxu0 0.0
      %1087 = vmatprep.subr.mxu0 0.0
      %1088 = vmatpush1.msra.mxu0 0.0
      %1089 = vmatprep.subr.mxu0 0.0
      %1090 = vmatpush1.msra.mxu0 0.0
      %1091 = vmatprep.subr.mxu0 0.0
      %1092 = vmatpush1.msra.mxu0 0.0
      %1093 = vmatprep.subr.mxu0 0.0
      %1094 = vmatpush1.msra.mxu0 0.0
      %1095 = vmatprep.subr.mxu0 0.0
      %1096 = vmatpush1.msra.mxu0 0.0
      %1097 = vmatprep.subr.mxu0 0.0
      %1098 = vmatpush1.msra.mxu0 0.0
      %1099 = vmatprep.subr.mxu0 0.0
      %1100 = vmatpush1.msra.mxu0 0.0
      %1101 = vmatprep.subr.mxu0 0.0
      %1102 = vmatpush1.msra.mxu0 0.0
      %1103 = vmatprep.subr.mxu0 0.0
      %1104 = vmatpush1.msra.mxu0 0.0
      %1105 = vmatprep.subr.mxu0 0.0
      %1106 = vmatpush1.msra.mxu0 0.0
      %1107 = vmatprep.subr.mxu0 0.0
      %1108 = vmatpush1.msra.mxu0 0.0
      %1109 = vmatprep.subr.mxu0 0.0
      %1110 = vmatpush1.msra.mxu0 0.0
      %1111 = vmatprep.subr.mxu0 0.0
      %1112 = vmatpush1.msra.mxu0 0.0
      %1113 = vmatprep.subr.mxu0 0.0
      %1114 = vmatpush1.msra.mxu0 0.0
      %1115 = vmatprep.subr.mxu0 0.0
      %1116 = vmatpush1.msra.mxu0 0.0
      %1117 = vmatprep.subr.mxu0 0.0
      %1118 = vmatpush1.msra.mxu0 0.0
      %1119 = vmatprep.subr.mxu0 0.0
      %1120 = vmatpush1.msra.mxu0 0.0
      %1121 = vmatprep.subr.mxu0 0.0
      %1122 = vmatpush1.msra.mxu0 0.0
      %1123 = vmatprep.subr.mxu0 0.0
      %1124 = vmatpush1.msra.mxu0 0.0
      %1125 = vmatprep.subr.mxu0 0.0
      %1126 = vmatpush1.msra.mxu0 0.0
      %1127 = vmatprep.subr.mxu0 0.0
      %1128 = vmatpush1.msra.mxu0 0.0
      %1129 = vmatprep.subr.mxu0 0.0
      %1130 = vmatpush1.msra.mxu0 0.0
      %1131 = vmatprep.subr.mxu0 0.0
      %1132 = vmatpush1.msra.mxu0 0.0
      %1133 = vmatprep.subr.mxu0 0.0
      %1134 = vmatpush1.msra.mxu0 0.0
      %1135 = vmatprep.subr.mxu0 0.0
      %1136 = vmatpush1.msra.mxu0 0.0
      %1137 = vmatprep.subr.mxu0 0.0
      %1138 = vmatpush1.msra.mxu0 0.0
      %1139 = vmatprep.subr.mxu0 0.0
      %1140 = vmatpush1.msra.mxu0 0.0
      %1141 = vmatprep.mubr.f32.mxu0 0.0
      %1142 = vmatmul.mubr.f32.gmra.mrb[0].mxu0 %v1075
      %v1143 = vpop.f32.mrb[0].mxu0
      %v1144 = vadd.f32 %v1071, %v1143
      %v1145 = vpop.f32.mrb[0].mxu0
      %1146 = vdwg.mxu0
      %v1147 = vld [vmem:[#allocation2 + $0x2] sm:$0xff]
      %s1148 = scalar_lea.vmem %s3, 64
      %v1149 = vld [vmem:[%s1148] sm:$0xff]
      %v1150 = vld [vmem:[%s1148 + $0x8] sm:$0xff]
      %v1151 = vld [vmem:[%s1148 + $0x10] sm:$0xff]
      %v1152 = vld [vmem:[%s1148 + $0x18] sm:$0xff]
      %v1154 = vsel %vm743, %v1147, 0
      %1156 = vmatprep.subr.mxu0 0.0
      %1157 = vmatpush1.msra.mxu0 %v1149
      %1158 = vmatprep.subr.mxu0 0.0
      %1159 = vmatpush1.msra.mxu0 %v1150
      %1160 = vmatprep.subr.mxu0 0.0
      %1161 = vmatpush1.msra.mxu0 %v1151
      %1162 = vmatprep.subr.mxu0 0.0
      %1163 = vmatpush1.msra.mxu0 %v1152
      %1164 = vmatprep.subr.mxu0 0.0
      %1165 = vmatpush1.msra.mxu0 0.0
      %1166 = vmatprep.subr.mxu0 0.0
      %1167 = vmatpush1.msra.mxu0 0.0
      %1168 = vmatprep.subr.mxu0 0.0
      %1169 = vmatpush1.msra.mxu0 0.0
      %1170 = vmatprep.subr.mxu0 0.0
      %1171 = vmatpush1.msra.mxu0 0.0
      %1172 = vmatprep.subr.mxu0 0.0
      %1173 = vmatpush1.msra.mxu0 0.0
      %1174 = vmatprep.subr.mxu0 0.0
      %1175 = vmatpush1.msra.mxu0 0.0
      %1176 = vmatprep.subr.mxu0 0.0
      %1177 = vmatpush1.msra.mxu0 0.0
      %1178 = vmatprep.subr.mxu0 0.0
      %1179 = vmatpush1.msra.mxu0 0.0
      %1180 = vmatprep.subr.mxu0 0.0
      %1181 = vmatpush1.msra.mxu0 0.0
      %1182 = vmatprep.subr.mxu0 0.0
      %1183 = vmatpush1.msra.mxu0 0.0
      %1184 = vmatprep.subr.mxu0 0.0
      %1185 = vmatpush1.msra.mxu0 0.0
      %1186 = vmatprep.subr.mxu0 0.0
      %1187 = vmatpush1.msra.mxu0 0.0
      %1188 = vmatprep.subr.mxu0 0.0
      %1189 = vmatpush1.msra.mxu0 0.0
      %1190 = vmatprep.subr.mxu0 0.0
      %1191 = vmatpush1.msra.mxu0 0.0
      %1192 = vmatprep.subr.mxu0 0.0
      %1193 = vmatpush1.msra.mxu0 0.0
      %1194 = vmatprep.subr.mxu0 0.0
      %1195 = vmatpush1.msra.mxu0 0.0
      %1196 = vmatprep.subr.mxu0 0.0
      %1197 = vmatpush1.msra.mxu0 0.0
      %1198 = vmatprep.subr.mxu0 0.0
      %1199 = vmatpush1.msra.mxu0 0.0
      %1200 = vmatprep.subr.mxu0 0.0
      %1201 = vmatpush1.msra.mxu0 0.0
      %1202 = vmatprep.subr.mxu0 0.0
      %1203 = vmatpush1.msra.mxu0 0.0
      %1204 = vmatprep.subr.mxu0 0.0
      %1205 = vmatpush1.msra.mxu0 0.0
      %1206 = vmatprep.subr.mxu0 0.0
      %1207 = vmatpush1.msra.mxu0 0.0
      %1208 = vmatprep.subr.mxu0 0.0
      %1209 = vmatpush1.msra.mxu0 0.0
      %1210 = vmatprep.subr.mxu0 0.0
      %1211 = vmatpush1.msra.mxu0 0.0
      %1212 = vmatprep.subr.mxu0 0.0
      %1213 = vmatpush1.msra.mxu0 0.0
      %1214 = vmatprep.subr.mxu0 0.0
      %1215 = vmatpush1.msra.mxu0 0.0
      %1216 = vmatprep.subr.mxu0 0.0
      %1217 = vmatpush1.msra.mxu0 0.0
      %1218 = vmatprep.subr.mxu0 0.0
      %1219 = vmatpush1.msra.mxu0 0.0
      %1220 = vmatprep.mubr.f32.mxu0 0.0
      %1221 = vmatmul.mubr.f32.gmra.mrb[0].mxu0 %v1154
      %v1222 = vpop.f32.mrb[0].mxu0
      %v1223 = vadd.f32 0.0, %v1222
      %v1224 = vpop.f32.mrb[0].mxu0
      %1225 = vdwg.mxu0
      %v1226 = vadd.f32 %v1144, %v1223
      %v1227 = vld [vmem:[%s4 + $0x2] sm:$0x1]
      %v1228 = vlaneseq
      %v1229 = vshrl.u32 %v1228, 7
      %v1230 = vsub.s32 0, %v1229
      %v1231 = vrot.slane %v1227, %v1230
      %v1232 = vadd.f32 %v1226, %v1231
      %v1233 = vadd.f32 %v738, %v1232
      %1234 = vst.msk [vmem:[%s222] sm:$0xff] %vm743, %v1233
      %p1235 = scmp.lt.s32.totalorder %s16, 1
      %s1236 = scalar_select %p1235, %s16, 1
      %s1237 = smul.addr %s1236, 8
      %s1238 = scalar_lea.vmem %s5, %s1237
      // Predicated region
      $region41: #{down_sample_block.1} parent=39 // pred_check
        %p1239 = pneg %p144
      $region42: #{down_sample_block.1} parent=39 // pred_check_branch
        %1241 = sbr.rel (%p1239) target = $region44
      $region43: #{down_sample_block.1} parent=39 // pred_region
        _
      $region44: #{down_sample_block.1} parent=39 // pred_fallthru
        _
    $region40: #{down_sample_block.1} parent=5 // pred_fallthru
      _
    %p1242 = scmp.le.s32.totalorder 2, %s11
    // Predicated region
    $region45: #{down_sample_block.1} parent=5 // pred_check
      %p1243 = pneg %p1242
    $region46: #{down_sample_block.1} parent=5 // pred_check_branch
      %1245 = sbr.rel (%p1243) target = $region48
    $region47: #{down_sample_block.1} parent=5 // pred_region
      %s1246 = ssub.s32 %s11, 2
      // Predicated region
      $region49: #{down_sample_block.1} parent=47 // pred_check
        %p1247 = pneg %p150
      $region50: #{down_sample_block.1} parent=47 // pred_check_branch
        %1249 = sbr.rel (%p1247) target = $region52
      $region51: #{down_sample_block.1} parent=47 // pred_region
        %p1250 = scmp.lt.s32.totalorder %s17, 1
        %s1251 = scalar_select %p1250, %s17, 1
        %s1252 = smul.addr %s1251, 8
        %s1253 = scalar_lea.vmem %s5, %s1252
      $region52: #{down_sample_block.1} parent=47 // pred_fallthru
        _
    $region48: #{down_sample_block.1} parent=5 // pred_fallthru
      _
  $region6: #{down_sample_block.1} parent=0 // loop_footer
    %s15 = sadd.s32 1, %s11
  $region7: #{down_sample_block.1} parent=0 // loop_footer_branch
    %10 = sbr.rel target = $region3
  $region8: #{down_sample_block.1} parent=0 // loop_exit
    _

</llo_original>
